<compile_context>
chip_gen: v6e
topology: v6e:2x2x1
jax: 0.10.0
libtpu: 0.0.40
codegen_flags: <defaults>
</compile_context>

<pallas_src>
import math

import jax
import jax.numpy as jnp
from jax import lax
from jax.experimental import pallas as pl
from jax.experimental.pallas import tpu as pltpu

# ---- small GPT-2-style config (synthetic weights, not a checkpoint load) ----
VOCAB = 128
N_EMBD = 128          # lane-dense (multiple of 128)
N_HEAD = 4
N_LAYER = 2
HEAD_DIM = N_EMBD // N_HEAD
MAX_POS = 32
LN_EPS = 1e-5


def _gelu_new(x):
    # GPT-2 "gelu_new" (tanh approximation), matches HF. f32 math.
    return 0.5 * x * (1.0 + jnp.tanh(
        math.sqrt(2.0 / math.pi) * (x + 0.044715 * x * x * x)))


# --------------------------- fused forward kernel ---------------------------

def _gpt2_forward_kernel(
    h0_ref, bias_ref, vec_ref,
    attn_w_ref, proj_w_ref, fc_w_ref, mlp_w_ref,
    lnf_ref, wte_t_ref,
    logits_ref,
    h_scr, ctx_scr,
):
    layer = pl.program_id(1)

    # Residual stream for this batch tile lives in VMEM across the layer axis.
    @pl.when(layer == 0)
    def _init():
        h_scr[...] = h0_ref[...]

    h = h_scr[...]                                    # [T, D] f32
    bias = bias_ref[...]                              # [T, T] additive mask, f32

    def ln(x, g, b):
        mu = jnp.mean(x, axis=-1, keepdims=True)
        var = jnp.mean(jnp.square(x - mu), axis=-1, keepdims=True)
        return (x - mu) * lax.rsqrt(var + LN_EPS) * g + b

    def mm(x, w_ref, b=None):
        # bf16 MXU operands, f32 accumulate.
        acc = jnp.dot(x.astype(jnp.bfloat16), w_ref[...],
                      preferred_element_type=jnp.float32)
        return acc if b is None else acc + b

    # Packed per-layer small vectors (one DMA): rows of [8, 4*N_EMBD].
    ln1_g = vec_ref[0:1, :N_EMBD]
    ln1_b = vec_ref[1:2, :N_EMBD]
    ln2_g = vec_ref[2:3, :N_EMBD]
    ln2_b = vec_ref[3:4, :N_EMBD]
    attn_b = vec_ref[4:5, :3 * N_EMBD]
    proj_b = vec_ref[5:6, :N_EMBD]
    fc_b = vec_ref[6:7, :4 * N_EMBD]
    mlp_b = vec_ref[7:8, :N_EMBD]

    # ---- attention sub-block (pre-LN) ----
    # NOTE: 1/sqrt(HEAD_DIM) is folded into the Q columns of attn_w/attn_b.
    xn = ln(h, ln1_g, ln1_b)                          # [T, D] f32
    qkv = mm(xn, attn_w_ref, attn_b)                  # [T, 3D] f32
    qkv16 = qkv.astype(jnp.bfloat16)                  # bf16 MXU operands

    for hd in range(N_HEAD):                          # static unroll over heads
        lo = hd * HEAD_DIM
        q_h = qkv16[:, lo:lo + HEAD_DIM]
        k_h = qkv16[:, N_EMBD + lo:N_EMBD + lo + HEAD_DIM]
        v_h = qkv16[:, 2 * N_EMBD + lo:2 * N_EMBD + lo + HEAD_DIM]
        # q @ k^T with f32 accumulate, plus the precomputed additive mask.
        s = lax.dot_general(q_h, k_h, (((1,), (1,)), ((), ())),
                            preferred_element_type=jnp.float32) + bias
        s = s - jnp.max(s, axis=-1, keepdims=True)
        p = jnp.exp(s)
        p = p * pl.reciprocal(jnp.sum(p, axis=-1, keepdims=True), approx=True)
        # Write each head's context straight into the VMEM scratch.
        ctx_scr[:, lo:lo + HEAD_DIM] = jnp.dot(
            p.astype(jnp.bfloat16), v_h, preferred_element_type=jnp.float32)

    h = h + mm(ctx_scr[...], proj_w_ref, proj_b)

    # ---- MLP sub-block (pre-LN) ----
    xn2 = ln(h, ln2_g, ln2_b)
    mhid = _gelu_new(mm(xn2, fc_w_ref, fc_b))         # [T, 4D] f32
    h = h + mm(mhid, mlp_w_ref, mlp_b)

    h_scr[...] = h

    # ---- final LN + tied LM head, fused on the last layer step ----
    @pl.when(layer == pl.num_programs(1) - 1)
    def _final():
        hf = ln(h, lnf_ref[0:1, :], lnf_ref[1:2, :])
        logits_ref[...] = jnp.dot(hf.astype(jnp.bfloat16), wte_t_ref[...],
                                  preferred_element_type=jnp.float32)


def _per_layer_spec(*tail):
    nd = len(tail)
    return pl.BlockSpec((None,) + tail, lambda b, l, _n=nd: (l,) + (0,) * _n)


def _resident_spec(*shape):
    nd = len(shape)
    return pl.BlockSpec(shape, lambda b, l, _n=nd: (0,) * _n)


def gpt2_lm_forward(params, input_ids, attention_mask):
    """Returns logits [B, T, VOCAB] (== GPT2LMHeadModel(...).logits)."""
    B, T = input_ids.shape
    M = B * T
    # Embedding gather stays as JAX glue (data-dependent gather on few tokens).
    h0 = (jnp.take(params["wte"], input_ids, axis=0)
          + params["wpe"][:T][None, :, :]).reshape(M, N_EMBD)
    # One additive attention bias: causal (-1e9 on future keys) + left-pad key
    # mask (-1e9 on padded keys).  Precomputed once, shared by all layers.
    causal = jnp.arange(T)[None, :] <= jnp.arange(T)[:, None]        # [T, T]
    pad = (1.0 - attention_mask.astype(jnp.float32)) * -1e9          # [B, T]
    attn_bias = jnp.where(causal, 0.0, -1e9)[None] + pad[:, None, :]  # [B,T,T]

    logits = pl.pallas_call(
        _gpt2_forward_kernel,
        out_shape=jax.ShapeDtypeStruct((M, VOCAB), jnp.float32),
        grid_spec=pltpu.PrefetchScalarGridSpec(
            num_scalar_prefetch=0,
            grid=(B, N_LAYER),
            in_specs=[
                pl.BlockSpec((T, N_EMBD), lambda b, l: (b, 0)),      # h0 tile
                pl.BlockSpec((None, T, T), lambda b, l: (b, 0, 0)),  # attn bias
                _per_layer_spec(8, 4 * N_EMBD),                      # packed vecs
                _per_layer_spec(N_EMBD, 3 * N_EMBD),                 # attn_w (bf16)
                _per_layer_spec(N_EMBD, N_EMBD),                     # proj_w (bf16)
                _per_layer_spec(N_EMBD, 4 * N_EMBD),                 # fc_w (bf16)
                _per_layer_spec(4 * N_EMBD, N_EMBD),                 # mlp_w (bf16)
                _resident_spec(2, N_EMBD),                           # lnf g/b
                _resident_spec(N_EMBD, VOCAB),                       # wte^T (bf16)
            ],
            out_specs=pl.BlockSpec((T, VOCAB), lambda b, l: (b, 0)),
            scratch_shapes=[
                pltpu.VMEM((T, N_EMBD), jnp.float32),   # residual stream
                pltpu.VMEM((T, N_EMBD), jnp.float32),   # attention context
            ],
        ),
        compiler_params=pltpu.CompilerParams(
            dimension_semantics=("parallel", "arbitrary"),
            vmem_limit_bytes=32 * 1024 * 1024),
    )(h0, attn_bias,
      params["vec"], params["attn_w"], params["proj_w"], params["fc_w"],
      params["mlp_w"], params["lnf"], params["wte_t"])
    return logits.reshape(B, T, VOCAB)


# --------------------------- params (stacked per layer) ---------------------

def init_params(key):
    std = 0.02
    k = jax.random.split(key, 16)
    wte = std * jax.random.normal(k[0], (VOCAB, N_EMBD), jnp.float32)
    wpe = std * jax.random.normal(k[1], (MAX_POS, N_EMBD), jnp.float32)

    def nrm(kk, shape, s):
        return s * jax.random.normal(kk, shape, jnp.float32)

    # Fold GPT-2's 1/sqrt(head_dim) attention-score scale into Q weights/bias:
    # (x @ Wq + bq) * s == x @ (Wq * s) + (bq * s).  Mathematically identical.
    q_scale = 1.0 / math.sqrt(HEAD_DIM)
    attn_w = nrm(k[2], (N_LAYER, N_EMBD, 3 * N_EMBD), std)
    attn_w = attn_w.at[:, :, :N_EMBD].multiply(q_scale)
    attn_b = nrm(k[3], (N_LAYER, 3 * N_EMBD), std)
    attn_b = attn_b.at[:, :N_EMBD].multiply(q_scale)

    d4 = 4 * N_EMBD
    # Packed per-layer small vectors: [N_LAYER, 8, 4*N_EMBD] (single DMA/layer).
    vec = jnp.zeros((N_LAYER, 8, d4), jnp.float32)
    vec = vec.at[:, 0, :N_EMBD].set(1.0 + nrm(k[4], (N_LAYER, N_EMBD), 0.05))  # ln1_g
    vec = vec.at[:, 1, :N_EMBD].set(nrm(k[5], (N_LAYER, N_EMBD), 0.05))        # ln1_b
    vec = vec.at[:, 2, :N_EMBD].set(1.0 + nrm(k[6], (N_LAYER, N_EMBD), 0.05))  # ln2_g
    vec = vec.at[:, 3, :N_EMBD].set(nrm(k[7], (N_LAYER, N_EMBD), 0.05))        # ln2_b
    vec = vec.at[:, 4, :3 * N_EMBD].set(attn_b)                                # attn_b
    vec = vec.at[:, 5, :N_EMBD].set(nrm(k[8], (N_LAYER, N_EMBD), std))         # proj_b
    vec = vec.at[:, 6, :].set(nrm(k[9], (N_LAYER, d4), std))                   # fc_b
    vec = vec.at[:, 7, :N_EMBD].set(nrm(k[10], (N_LAYER, N_EMBD), std))        # mlp_b

    lnf = jnp.stack([1.0 + nrm(k[11], (N_EMBD,), 0.05),
                     nrm(k[12], (N_EMBD,), 0.05)], axis=0)                     # [2, D]

    return {
        "wte": wte,
        "wpe": wpe,
        "wte_t": wte.T.astype(jnp.bfloat16),       # tied LM head, pre-transposed
        "vec": vec,
        "lnf": lnf,
        "attn_w": attn_w.astype(jnp.bfloat16),
        "proj_w": nrm(k[13], (N_LAYER, N_EMBD, N_EMBD), std).astype(jnp.bfloat16),
        "fc_w": nrm(k[14], (N_LAYER, N_EMBD, d4), std).astype(jnp.bfloat16),
        "mlp_w": nrm(k[15], (N_LAYER, d4, N_EMBD), std).astype(jnp.bfloat16),
    }


# --------------------------- pure-JAX reference (same math) -----------------

def _reference_forward(params, input_ids, attention_mask):
    B, T = input_ids.shape
    h = jnp.take(params["wte"], input_ids, axis=0) + params["wpe"][:T][None]
    causal = jnp.arange(T)[None, :] <= jnp.arange(T)[:, None]
    pad = (1.0 - attention_mask.astype(jnp.float32)) * -1e9
    bias = jnp.where(causal, 0.0, -1e9)[None, None] + pad[:, None, None, :]

    def ln(x, g, b):
        mu = jnp.mean(x, -1, keepdims=True)
        var = jnp.mean(jnp.square(x - mu), -1, keepdims=True)
        return (x - mu) * lax.rsqrt(var + LN_EPS) * g + b

    def mm(x, wgt, bb=None):
        y = jnp.dot(x.astype(jnp.bfloat16), wgt, preferred_element_type=jnp.float32)
        return y if bb is None else y + bb

    vec = params["vec"]
    for l in range(N_LAYER):
        ln1_g, ln1_b = vec[l, 0, :N_EMBD], vec[l, 1, :N_EMBD]
        ln2_g, ln2_b = vec[l, 2, :N_EMBD], vec[l, 3, :N_EMBD]
        attn_b = vec[l, 4, :3 * N_EMBD]
        proj_b = vec[l, 5, :N_EMBD]
        fc_b = vec[l, 6, :4 * N_EMBD]
        mlp_b = vec[l, 7, :N_EMBD]

        xn = ln(h, ln1_g, ln1_b)
        qkv = mm(xn.reshape(B * T, -1), params["attn_w"][l], attn_b)
        qkv = qkv.reshape(B, T, 3 * N_EMBD)
        q, k, v = jnp.split(qkv, 3, axis=-1)

        def heads(x):
            return x.reshape(B, T, N_HEAD, HEAD_DIM).transpose(0, 2, 1, 3)

        qh, kh, vh = heads(q), heads(k), heads(v)
        # 1/sqrt(HEAD_DIM) already folded into the Q weights/bias at init.
        s = jnp.einsum("bhqd,bhkd->bhqk", qh.astype(jnp.bfloat16),
                       kh.astype(jnp.bfloat16),
                       preferred_element_type=jnp.float32) + bias
        p = jax.nn.softmax(s, axis=-1)
        ctx = jnp.einsum("bhqk,bhkd->bhqd", p.astype(jnp.bfloat16),
                         vh.astype(jnp.bfloat16),
                         preferred_element_type=jnp.float32)
        ctx = ctx.transpose(0, 2, 1, 3).reshape(B * T, N_EMBD)
        h = h + mm(ctx, params["proj_w"][l], proj_b).reshape(B, T, N_EMBD)

        xn2 = ln(h, ln2_g, ln2_b)
        mhid = _gelu_new(mm(xn2.reshape(B * T, -1), params["fc_w"][l], fc_b))
        h = h + mm(mhid, params["mlp_w"][l], mlp_b).reshape(B, T, N_EMBD)

    hf = ln(h, params["lnf"][0], params["lnf"][1])
    logits = jnp.dot(hf.reshape(B * T, -1).astype(jnp.bfloat16),
                     params["wte_t"], preferred_element_type=jnp.float32)
    return logits.reshape(B, T, VOCAB)


# TODO(synk): `generate` (autoregressive decoding with KV cache / sampling) is
# host-side control flow over the forward pass and is not implemented here.


if __name__ == "__main__":
    B, T = 2, 8
    key = jax.random.PRNGKey(0)
    params = init_params(jax.random.PRNGKey(42))

    input_ids = jax.random.randint(key, (B, T), 0, VOCAB, dtype=jnp.int32)
    # left padding (tokenizer.padding_side = 'left'): first example padded by 2.
    attention_mask = jnp.array(
        [[0, 0, 1, 1, 1, 1, 1, 1],
         [1, 1, 1, 1, 1, 1, 1, 1]], dtype=jnp.int32)

    fwd = jax.jit(gpt2_lm_forward)
    logits = fwd(params, input_ids, attention_mask)
    jax.block_until_ready(logits)

    assert logits.shape == (B, T, VOCAB)
    assert bool(jnp.all(jnp.isfinite(logits)))

    ref = jax.jit(_reference_forward)(params, input_ids, attention_mask)
    jax.block_until_ready(ref)
    assert bool(jnp.allclose(logits, ref, atol=2e-2, rtol=2e-2)), (
        float(jnp.max(jnp.abs(logits - ref))))

    print("KERNEL_OK")
</pallas_src>

<mosaic_0001>
module attributes {stable_mosaic.version = 11 : i64} {
  func.func @_gpt2_forward_kernel(%arg0: i32, %arg1: i32, %arg2: memref<8x128xf32, #tpu.memory_space<vmem>>, %arg3: memref<1x8x8xf32, #tpu.memory_space<vmem>>, %arg4: memref<1x8x512xf32, #tpu.memory_space<vmem>>, %arg5: memref<1x128x384xbf16, #tpu.memory_space<vmem>>, %arg6: memref<1x128x128xbf16, #tpu.memory_space<vmem>>, %arg7: memref<1x128x512xbf16, #tpu.memory_space<vmem>>, %arg8: memref<1x512x128xbf16, #tpu.memory_space<vmem>>, %arg9: memref<2x128xf32, #tpu.memory_space<vmem>>, %arg10: memref<128x128xbf16, #tpu.memory_space<vmem>>, %arg11: memref<8x128xf32, #tpu.memory_space<vmem>>, %arg12: memref<8x128xf32, #tpu.memory_space<vmem>>, %arg13: memref<8x128xf32, #tpu.memory_space<vmem>>) attributes {dimension_semantics = [#tpu.dimension_semantics<parallel>, #tpu.dimension_semantics<arbitrary>], iteration_bounds = array<i64: 2, 2>, scalar_prefetch = 0 : i64, scratch_operands = 2 : i64, tpu.core_type = #tpu.core_type<tc>, window_params = [{transform_indices = @transform_0, window_bounds = array<i64: 8, 128>}, {transform_indices = @transform_1, window_bounds = array<i64: 1, 8, 8>}, {transform_indices = @transform_2, window_bounds = array<i64: 1, 8, 512>}, {transform_indices = @transform_3, window_bounds = array<i64: 1, 128, 384>}, {transform_indices = @transform_4, window_bounds = array<i64: 1, 128, 128>}, {transform_indices = @transform_5, window_bounds = array<i64: 1, 128, 512>}, {transform_indices = @transform_6, window_bounds = array<i64: 1, 512, 128>}, {pipeline_mode = #tpu.pipeline_mode<synchronous>, transform_indices = @transform_7, window_bounds = array<i64: 2, 128>}, {pipeline_mode = #tpu.pipeline_mode<synchronous>, transform_indices = @transform_8, window_bounds = array<i64: 128, 128>}, {transform_indices = @transform_9, window_bounds = array<i64: 8, 128>}]} {
    %c0_i32 = arith.constant 0 : i32
    %0 = arith.cmpi eq, %arg1, %c0_i32 : i32
    %1 = arith.extui %0 : i1 to i32
    %c0_i32_0 = arith.constant 0 : i32
    %2 = arith.cmpi ne, %1, %c0_i32_0 : i32
    scf.if %2 {
      %c0_77 = arith.constant 0 : index
      %c0_78 = arith.constant 0 : index
      %183 = vector.load %arg2[%c0_77, %c0_78] : memref<8x128xf32, #tpu.memory_space<vmem>>, vector<8x128xf32>
      %c0_79 = arith.constant 0 : index
      %c0_80 = arith.constant 0 : index
      %184 = vector.load %arg12[%c0_79, %c0_80] : memref<8x128xf32, #tpu.memory_space<vmem>>, vector<8x128xf32>
      tpu.vector_store %arg12[%c0_79, %c0_80], %183 {strides = array<i32>} : memref<8x128xf32, #tpu.memory_space<vmem>>, vector<8x128xf32>,
    } else {
    }
    %c0 = arith.constant 0 : index
    %c0_1 = arith.constant 0 : index
    %3 = vector.load %arg12[%c0, %c0_1] : memref<8x128xf32, #tpu.memory_space<vmem>>, vector<8x128xf32>
    %c0_2 = arith.constant 0 : index
    %c0_3 = arith.constant 0 : index
    %c0_4 = arith.constant 0 : index
    %4 = vector.load %arg3[%c0_2, %c0_3, %c0_4] : memref<1x8x8xf32, #tpu.memory_space<vmem>>, vector<1x8x8xf32>
    %5 = vector.shape_cast %4 : vector<1x8x8xf32> to vector<8x8xf32>
    %c0_5 = arith.constant 0 : index
    %c0_6 = arith.constant 0 : index
    %c0_7 = arith.constant 0 : index
    %6 = vector.load %arg4[%c0_5, %c0_6, %c0_7] : memref<1x8x512xf32, #tpu.memory_space<vmem>>, vector<1x1x128xf32>
    %7 = vector.shape_cast %6 : vector<1x1x128xf32> to vector<1x128xf32>
    %c0_8 = arith.constant 0 : index
    %c1 = arith.constant 1 : index
    %c0_9 = arith.constant 0 : index
    %8 = vector.load %arg4[%c0_8, %c1, %c0_9] : memref<1x8x512xf32, #tpu.memory_space<vmem>>, vector<1x1x128xf32>
    %9 = vector.shape_cast %8 : vector<1x1x128xf32> to vector<1x128xf32>
    %c0_10 = arith.constant 0 : index
    %c2 = arith.constant 2 : index
    %c0_11 = arith.constant 0 : index
    %10 = vector.load %arg4[%c0_10, %c2, %c0_11] : memref<1x8x512xf32, #tpu.memory_space<vmem>>, vector<1x1x128xf32>
    %11 = vector.shape_cast %10 : vector<1x1x128xf32> to vector<1x128xf32>
    %c0_12 = arith.constant 0 : index
    %c3 = arith.constant 3 : index
    %c0_13 = arith.constant 0 : index
    %12 = vector.load %arg4[%c0_12, %c3, %c0_13] : memref<1x8x512xf32, #tpu.memory_space<vmem>>, vector<1x1x128xf32>
    %13 = vector.shape_cast %12 : vector<1x1x128xf32> to vector<1x128xf32>
    %c0_14 = arith.constant 0 : index
    %c4 = arith.constant 4 : index
    %c0_15 = arith.constant 0 : index
    %14 = vector.load %arg4[%c0_14, %c4, %c0_15] : memref<1x8x512xf32, #tpu.memory_space<vmem>>, vector<1x1x384xf32>
    %15 = vector.shape_cast %14 : vector<1x1x384xf32> to vector<1x384xf32>
    %c0_16 = arith.constant 0 : index
    %c5 = arith.constant 5 : index
    %c0_17 = arith.constant 0 : index
    %16 = vector.load %arg4[%c0_16, %c5, %c0_17] : memref<1x8x512xf32, #tpu.memory_space<vmem>>, vector<1x1x128xf32>
    %17 = vector.shape_cast %16 : vector<1x1x128xf32> to vector<1x128xf32>
    %c0_18 = arith.constant 0 : index
    %c6 = arith.constant 6 : index
    %c0_19 = arith.constant 0 : index
    %18 = vector.load %arg4[%c0_18, %c6, %c0_19] : memref<1x8x512xf32, #tpu.memory_space<vmem>>, vector<1x1x512xf32>
    %19 = vector.shape_cast %18 : vector<1x1x512xf32> to vector<1x512xf32>
    %c0_20 = arith.constant 0 : index
    %c7 = arith.constant 7 : index
    %c0_21 = arith.constant 0 : index
    %20 = vector.load %arg4[%c0_20, %c7, %c0_21] : memref<1x8x512xf32, #tpu.memory_space<vmem>>, vector<1x1x128xf32>
    %21 = vector.shape_cast %20 : vector<1x1x128xf32> to vector<1x128xf32>
    %cst = arith.constant dense<0.000000e+00> : vector<8xf32>
    %22 = vector.multi_reduction <add>, %3, %cst [1] : vector<8x128xf32> to vector<8xf32>
    %23 = vector.shape_cast %22 : vector<8xf32> to vector<8x1xf32>
    %cst_22 = arith.constant 1.280000e+02 : f32
    %24 = vector.broadcast %cst_22 : f32 to vector<8x1xf32>
    %25 = arith.divf %23, %24 : vector<8x1xf32>
    %26 = vector.broadcast %25 : vector<8x1xf32> to vector<8x128xf32>
    %27 = arith.subf %3, %26 : vector<8x128xf32>
    %28 = arith.mulf %27, %27 : vector<8x128xf32>
    %cst_23 = arith.constant dense<0.000000e+00> : vector<8xf32>
    %29 = vector.multi_reduction <add>, %28, %cst_23 [1] : vector<8x128xf32> to vector<8xf32>
    %30 = vector.shape_cast %29 : vector<8xf32> to vector<8x1xf32>
    %cst_24 = arith.constant 1.280000e+02 : f32
    %31 = vector.broadcast %cst_24 : f32 to vector<8x1xf32>
    %32 = arith.divf %30, %31 : vector<8x1xf32>
    %33 = vector.broadcast %25 : vector<8x1xf32> to vector<8x128xf32>
    %34 = arith.subf %3, %33 : vector<8x128xf32>
    %cst_25 = arith.constant 9.99999974E-6 : f32
    %35 = vector.broadcast %cst_25 : f32 to vector<8x1xf32>
    %36 = arith.addf %32, %35 : vector<8x1xf32>
    %37 = math.rsqrt %36 : vector<8x1xf32>
    %38 = vector.broadcast %37 : vector<8x1xf32> to vector<8x128xf32>
    %39 = arith.mulf %34, %38 : vector<8x128xf32>
    %40 = vector.broadcast %7 : vector<1x128xf32> to vector<8x128xf32>
    %41 = arith.mulf %39, %40 : vector<8x128xf32>
    %42 = vector.broadcast %9 : vector<1x128xf32> to vector<8x128xf32>
    %43 = arith.addf %41, %42 : vector<8x128xf32>
    %44 = arith.truncf %43 : vector<8x128xf32> to vector<8x128xbf16>
    %c0_26 = arith.constant 0 : index
    %c0_27 = arith.constant 0 : index
    %c0_28 = arith.constant 0 : index
    %45 = vector.load %arg5[%c0_26, %c0_27, %c0_28] : memref<1x128x384xbf16, #tpu.memory_space<vmem>>, vector<1x128x384xbf16>
    %46 = vector.shape_cast %45 : vector<1x128x384xbf16> to vector<128x384xbf16>
    %cst_29 = arith.constant dense<0.000000e+00> : vector<8x384xf32>
    %47 = tpu.matmul %44, %46, %cst_29 {dimension_numbers = #tpu.dot_dimension_numbers<[1], [0], [0], [1], [0, 0, 1, 1], [], []>} : vector<8x128xbf16>, vector<128x384xbf16>, vector<8x384xf32> -> vector<8x384xf32>
    %48 = vector.broadcast %15 : vector<1x384xf32> to vector<8x384xf32>
    %49 = arith.addf %47, %48 : vector<8x384xf32>
    %50 = arith.truncf %49 : vector<8x384xf32> to vector<8x384xbf16>
    %51 = vector.extract_strided_slice %50 {offsets = [0, 0], sizes = [8, 32], strides = [1, 1]} : vector<8x384xbf16> to vector<8x32xbf16>
    %52 = vector.extract_strided_slice %50 {offsets = [0, 128], sizes = [8, 32], strides = [1, 1]} : vector<8x384xbf16> to vector<8x32xbf16>
    %53 = vector.extract_strided_slice %50 {offsets = [0, 256], sizes = [8, 32], strides = [1, 1]} : vector<8x384xbf16> to vector<8x32xbf16>
    %cst_30 = arith.constant dense<0.000000e+00> : vector<8x8xf32>
    %54 = tpu.matmul %51, %52, %cst_30 {dimension_numbers = #tpu.dot_dimension_numbers<[1], [1], [0], [0], [0, 0, 1, 0], [], []>} : vector<8x32xbf16>, vector<8x32xbf16>, vector<8x8xf32> -> vector<8x8xf32>
    %55 = arith.addf %54, %5 : vector<8x8xf32>
    %cst_31 = arith.constant dense<0xFF800000> : vector<8xf32>
    %56 = vector.multi_reduction <maximumf>, %55, %cst_31 [1] : vector<8x8xf32> to vector<8xf32>
    %57 = vector.shape_cast %56 : vector<8xf32> to vector<8x1xf32>
    %58 = vector.broadcast %57 : vector<8x1xf32> to vector<8x8xf32>
    %59 = arith.subf %55, %58 : vector<8x8xf32>
    %60 = math.exp %59 : vector<8x8xf32>
    %cst_32 = arith.constant dense<0.000000e+00> : vector<8xf32>
    %61 = vector.multi_reduction <add>, %60, %cst_32 [1] : vector<8x8xf32> to vector<8xf32>
    %62 = vector.shape_cast %61 : vector<8xf32> to vector<8x1xf32>
    %63 = tpu.reciprocal %62 {approx = true} : vector<8x1xf32> -> vector<8x1xf32>
    %64 = vector.broadcast %63 : vector<8x1xf32> to vector<8x8xf32>
    %65 = arith.mulf %60, %64 : vector<8x8xf32>
    %66 = arith.truncf %65 : vector<8x8xf32> to vector<8x8xbf16>
    %cst_33 = arith.constant dense<0.000000e+00> : vector<8x32xf32>
    %67 = tpu.matmul %66, %53, %cst_33 {dimension_numbers = #tpu.dot_dimension_numbers<[1], [0], [0], [1], [0, 0, 1, 1], [], []>} : vector<8x8xbf16>, vector<8x32xbf16>, vector<8x32xf32> -> vector<8x32xf32>
    %c0_34 = arith.constant 0 : index
    %c0_35 = arith.constant 0 : index
    %68 = vector.load %arg13[%c0_34, %c0_35] : memref<8x128xf32, #tpu.memory_space<vmem>>, vector<8x32xf32>
    tpu.vector_store %arg13[%c0_34, %c0_35], %67 {strides = array<i32>} : memref<8x128xf32, #tpu.memory_space<vmem>>, vector<8x32xf32>,
    %69 = vector.extract_strided_slice %50 {offsets = [0, 32], sizes = [8, 32], strides = [1, 1]} : vector<8x384xbf16> to vector<8x32xbf16>
    %70 = vector.extract_strided_slice %50 {offsets = [0, 160], sizes = [8, 32], strides = [1, 1]} : vector<8x384xbf16> to vector<8x32xbf16>
    %71 = vector.extract_strided_slice %50 {offsets = [0, 288], sizes = [8, 32], strides = [1, 1]} : vector<8x384xbf16> to vector<8x32xbf16>
    %cst_36 = arith.constant dense<0.000000e+00> : vector<8x8xf32>
    %72 = tpu.matmul %69, %70, %cst_36 {dimension_numbers = #tpu.dot_dimension_numbers<[1], [1], [0], [0], [0, 0, 1, 0], [], []>} : vector<8x32xbf16>, vector<8x32xbf16>, vector<8x8xf32> -> vector<8x8xf32>
    %73 = arith.addf %72, %5 : vector<8x8xf32>
    %cst_37 = arith.constant dense<0xFF800000> : vector<8xf32>
    %74 = vector.multi_reduction <maximumf>, %73, %cst_37 [1] : vector<8x8xf32> to vector<8xf32>
    %75 = vector.shape_cast %74 : vector<8xf32> to vector<8x1xf32>
    %76 = vector.broadcast %75 : vector<8x1xf32> to vector<8x8xf32>
    %77 = arith.subf %73, %76 : vector<8x8xf32>
    %78 = math.exp %77 : vector<8x8xf32>
    %cst_38 = arith.constant dense<0.000000e+00> : vector<8xf32>
    %79 = vector.multi_reduction <add>, %78, %cst_38 [1] : vector<8x8xf32> to vector<8xf32>
    %80 = vector.shape_cast %79 : vector<8xf32> to vector<8x1xf32>
    %81 = tpu.reciprocal %80 {approx = true} : vector<8x1xf32> -> vector<8x1xf32>
    %82 = vector.broadcast %81 : vector<8x1xf32> to vector<8x8xf32>
    %83 = arith.mulf %78, %82 : vector<8x8xf32>
    %84 = arith.truncf %83 : vector<8x8xf32> to vector<8x8xbf16>
    %cst_39 = arith.constant dense<0.000000e+00> : vector<8x32xf32>
    %85 = tpu.matmul %84, %71, %cst_39 {dimension_numbers = #tpu.dot_dimension_numbers<[1], [0], [0], [1], [0, 0, 1, 1], [], []>} : vector<8x8xbf16>, vector<8x32xbf16>, vector<8x32xf32> -> vector<8x32xf32>
    %c0_40 = arith.constant 0 : index
    %c32 = arith.constant 32 : index
    %86 = vector.load %arg13[%c0_40, %c32] : memref<8x128xf32, #tpu.memory_space<vmem>>, vector<8x32xf32>
    tpu.vector_store %arg13[%c0_40, %c32], %85 {strides = array<i32>} : memref<8x128xf32, #tpu.memory_space<vmem>>, vector<8x32xf32>,
    %87 = vector.extract_strided_slice %50 {offsets = [0, 64], sizes = [8, 32], strides = [1, 1]} : vector<8x384xbf16> to vector<8x32xbf16>
    %88 = vector.extract_strided_slice %50 {offsets = [0, 192], sizes = [8, 32], strides = [1, 1]} : vector<8x384xbf16> to vector<8x32xbf16>
    %89 = vector.extract_strided_slice %50 {offsets = [0, 320], sizes = [8, 32], strides = [1, 1]} : vector<8x384xbf16> to vector<8x32xbf16>
    %cst_41 = arith.constant dense<0.000000e+00> : vector<8x8xf32>
    %90 = tpu.matmul %87, %88, %cst_41 {dimension_numbers = #tpu.dot_dimension_numbers<[1], [1], [0], [0], [0, 0, 1, 0], [], []>} : vector<8x32xbf16>, vector<8x32xbf16>, vector<8x8xf32> -> vector<8x8xf32>
    %91 = arith.addf %90, %5 : vector<8x8xf32>
    %cst_42 = arith.constant dense<0xFF800000> : vector<8xf32>
    %92 = vector.multi_reduction <maximumf>, %91, %cst_42 [1] : vector<8x8xf32> to vector<8xf32>
    %93 = vector.shape_cast %92 : vector<8xf32> to vector<8x1xf32>
    %94 = vector.broadcast %93 : vector<8x1xf32> to vector<8x8xf32>
    %95 = arith.subf %91, %94 : vector<8x8xf32>
    %96 = math.exp %95 : vector<8x8xf32>
    %cst_43 = arith.constant dense<0.000000e+00> : vector<8xf32>
    %97 = vector.multi_reduction <add>, %96, %cst_43 [1] : vector<8x8xf32> to vector<8xf32>
    %98 = vector.shape_cast %97 : vector<8xf32> to vector<8x1xf32>
    %99 = tpu.reciprocal %98 {approx = true} : vector<8x1xf32> -> vector<8x1xf32>
    %100 = vector.broadcast %99 : vector<8x1xf32> to vector<8x8xf32>
    %101 = arith.mulf %96, %100 : vector<8x8xf32>
    %102 = arith.truncf %101 : vector<8x8xf32> to vector<8x8xbf16>
    %cst_44 = arith.constant dense<0.000000e+00> : vector<8x32xf32>
    %103 = tpu.matmul %102, %89, %cst_44 {dimension_numbers = #tpu.dot_dimension_numbers<[1], [0], [0], [1], [0, 0, 1, 1], [], []>} : vector<8x8xbf16>, vector<8x32xbf16>, vector<8x32xf32> -> vector<8x32xf32>
    %c0_45 = arith.constant 0 : index
    %c64 = arith.constant 64 : index
    %104 = vector.load %arg13[%c0_45, %c64] : memref<8x128xf32, #tpu.memory_space<vmem>>, vector<8x32xf32>
    tpu.vector_store %arg13[%c0_45, %c64], %103 {strides = array<i32>} : memref<8x128xf32, #tpu.memory_space<vmem>>, vector<8x32xf32>,
    %105 = vector.extract_strided_slice %50 {offsets = [0, 96], sizes = [8, 32], strides = [1, 1]} : vector<8x384xbf16> to vector<8x32xbf16>
    %106 = vector.extract_strided_slice %50 {offsets = [0, 224], sizes = [8, 32], strides = [1, 1]} : vector<8x384xbf16> to vector<8x32xbf16>
    %107 = vector.extract_strided_slice %50 {offsets = [0, 352], sizes = [8, 32], strides = [1, 1]} : vector<8x384xbf16> to vector<8x32xbf16>
    %cst_46 = arith.constant dense<0.000000e+00> : vector<8x8xf32>
    %108 = tpu.matmul %105, %106, %cst_46 {dimension_numbers = #tpu.dot_dimension_numbers<[1], [1], [0], [0], [0, 0, 1, 0], [], []>} : vector<8x32xbf16>, vector<8x32xbf16>, vector<8x8xf32> -> vector<8x8xf32>
    %109 = arith.addf %108, %5 : vector<8x8xf32>
    %cst_47 = arith.constant dense<0xFF800000> : vector<8xf32>
    %110 = vector.multi_reduction <maximumf>, %109, %cst_47 [1] : vector<8x8xf32> to vector<8xf32>
    %111 = vector.shape_cast %110 : vector<8xf32> to vector<8x1xf32>
    %112 = vector.broadcast %111 : vector<8x1xf32> to vector<8x8xf32>
    %113 = arith.subf %109, %112 : vector<8x8xf32>
    %114 = math.exp %113 : vector<8x8xf32>
    %cst_48 = arith.constant dense<0.000000e+00> : vector<8xf32>
    %115 = vector.multi_reduction <add>, %114, %cst_48 [1] : vector<8x8xf32> to vector<8xf32>
    %116 = vector.shape_cast %115 : vector<8xf32> to vector<8x1xf32>
    %117 = tpu.reciprocal %116 {approx = true} : vector<8x1xf32> -> vector<8x1xf32>
    %118 = vector.broadcast %117 : vector<8x1xf32> to vector<8x8xf32>
    %119 = arith.mulf %114, %118 : vector<8x8xf32>
    %120 = arith.truncf %119 : vector<8x8xf32> to vector<8x8xbf16>
    %cst_49 = arith.constant dense<0.000000e+00> : vector<8x32xf32>
    %121 = tpu.matmul %120, %107, %cst_49 {dimension_numbers = #tpu.dot_dimension_numbers<[1], [0], [0], [1], [0, 0, 1, 1], [], []>} : vector<8x8xbf16>, vector<8x32xbf16>, vector<8x32xf32> -> vector<8x32xf32>
    %c0_50 = arith.constant 0 : index
    %c96 = arith.constant 96 : index
    %122 = vector.load %arg13[%c0_50, %c96] : memref<8x128xf32, #tpu.memory_space<vmem>>, vector<8x32xf32>
    tpu.vector_store %arg13[%c0_50, %c96], %121 {strides = array<i32>} : memref<8x128xf32, #tpu.memory_space<vmem>>, vector<8x32xf32>,
    %c0_51 = arith.constant 0 : index
    %c0_52 = arith.constant 0 : index
    %123 = vector.load %arg13[%c0_51, %c0_52] : memref<8x128xf32, #tpu.memory_space<vmem>>, vector<8x128xf32>
    %124 = arith.truncf %123 : vector<8x128xf32> to vector<8x128xbf16>
    %c0_53 = arith.constant 0 : index
    %c0_54 = arith.constant 0 : index
    %c0_55 = arith.constant 0 : index
    %125 = vector.load %arg6[%c0_53, %c0_54, %c0_55] : memref<1x128x128xbf16, #tpu.memory_space<vmem>>, vector<1x128x128xbf16>
    %126 = vector.shape_cast %125 : vector<1x128x128xbf16> to vector<128x128xbf16>
    %cst_56 = arith.constant dense<0.000000e+00> : vector<8x128xf32>
    %127 = tpu.matmul %124, %126, %cst_56 {dimension_numbers = #tpu.dot_dimension_numbers<[1], [0], [0], [1], [0, 0, 1, 1], [], []>} : vector<8x128xbf16>, vector<128x128xbf16>, vector<8x128xf32> -> vector<8x128xf32>
    %128 = vector.broadcast %17 : vector<1x128xf32> to vector<8x128xf32>
    %129 = arith.addf %127, %128 : vector<8x128xf32>
    %130 = arith.addf %3, %129 : vector<8x128xf32>
    %cst_57 = arith.constant dense<0.000000e+00> : vector<8xf32>
    %131 = vector.multi_reduction <add>, %130, %cst_57 [1] : vector<8x128xf32> to vector<8xf32>
    %132 = vector.shape_cast %131 : vector<8xf32> to vector<8x1xf32>
    %cst_58 = arith.constant 1.280000e+02 : f32
    %133 = vector.broadcast %cst_58 : f32 to vector<8x1xf32>
    %134 = arith.divf %132, %133 : vector<8x1xf32>
    %135 = vector.broadcast %134 : vector<8x1xf32> to vector<8x128xf32>
    %136 = arith.subf %130, %135 : vector<8x128xf32>
    %137 = arith.mulf %136, %136 : vector<8x128xf32>
    %cst_59 = arith.constant dense<0.000000e+00> : vector<8xf32>
    %138 = vector.multi_reduction <add>, %137, %cst_59 [1] : vector<8x128xf32> to vector<8xf32>
    %139 = vector.shape_cast %138 : vector<8xf32> to vector<8x1xf32>
    %cst_60 = arith.constant 1.280000e+02 : f32
    %140 = vector.broadcast %cst_60 : f32 to vector<8x1xf32>
    %141 = arith.divf %139, %140 : vector<8x1xf32>
    %142 = vector.broadcast %134 : vector<8x1xf32> to vector<8x128xf32>
    %143 = arith.subf %130, %142 : vector<8x128xf32>
    %cst_61 = arith.constant 9.99999974E-6 : f32
    %144 = vector.broadcast %cst_61 : f32 to vector<8x1xf32>
    %145 = arith.addf %141, %144 : vector<8x1xf32>
    %146 = math.rsqrt %145 : vector<8x1xf32>
    %147 = vector.broadcast %146 : vector<8x1xf32> to vector<8x128xf32>
    %148 = arith.mulf %143, %147 : vector<8x128xf32>
    %149 = vector.broadcast %11 : vector<1x128xf32> to vector<8x128xf32>
    %150 = arith.mulf %148, %149 : vector<8x128xf32>
    %151 = vector.broadcast %13 : vector<1x128xf32> to vector<8x128xf32>
    %152 = arith.addf %150, %151 : vector<8x128xf32>
    %153 = arith.truncf %152 : vector<8x128xf32> to vector<8x128xbf16>
    %c0_62 = arith.constant 0 : index
    %c0_63 = arith.constant 0 : index
    %c0_64 = arith.constant 0 : index
    %154 = vector.load %arg7[%c0_62, %c0_63, %c0_64] : memref<1x128x512xbf16, #tpu.memory_space<vmem>>, vector<1x128x512xbf16>
    %155 = vector.shape_cast %154 : vector<1x128x512xbf16> to vector<128x512xbf16>
    %cst_65 = arith.constant dense<0.000000e+00> : vector<8x512xf32>
    %156 = tpu.matmul %153, %155, %cst_65 {dimension_numbers = #tpu.dot_dimension_numbers<[1], [0], [0], [1], [0, 0, 1, 1], [], []>} : vector<8x128xbf16>, vector<128x512xbf16>, vector<8x512xf32> -> vector<8x512xf32>
    %157 = vector.broadcast %19 : vector<1x512xf32> to vector<8x512xf32>
    %158 = arith.addf %156, %157 : vector<8x512xf32>
    %cst_66 = arith.constant 5.000000e-01 : f32
    %159 = vector.broadcast %cst_66 : f32 to vector<8x512xf32>
    %160 = arith.mulf %159, %158 : vector<8x512xf32>
    %cst_67 = arith.constant 4.471500e-02 : f32
    %161 = vector.broadcast %cst_67 : f32 to vector<8x512xf32>
    %162 = arith.mulf %161, %158 : vector<8x512xf32>
    %163 = arith.mulf %162, %158 : vector<8x512xf32>
    %164 = arith.mulf %163, %158 : vector<8x512xf32>
    %165 = arith.addf %158, %164 : vector<8x512xf32>
    %cst_68 = arith.constant 0.797884583 : f32
    %166 = vector.broadcast %cst_68 : f32 to vector<8x512xf32>
    %167 = arith.mulf %166, %165 : vector<8x512xf32>
    %168 = math.tanh %167 : vector<8x512xf32>
    %cst_69 = arith.constant 1.000000e+00 : f32
    %169 = vector.broadcast %cst_69 : f32 to vector<8x512xf32>
    %170 = arith.addf %169, %168 : vector<8x512xf32>
    %171 = arith.mulf %160, %170 : vector<8x512xf32>
    %172 = arith.truncf %171 : vector<8x512xf32> to vector<8x512xbf16>
    %c0_70 = arith.constant 0 : index
    %c0_71 = arith.constant 0 : index
    %c0_72 = arith.constant 0 : index
    %173 = vector.load %arg8[%c0_70, %c0_71, %c0_72] : memref<1x512x128xbf16, #tpu.memory_space<vmem>>, vector<1x512x128xbf16>
    %174 = vector.shape_cast %173 : vector<1x512x128xbf16> to vector<512x128xbf16>
    %cst_73 = arith.constant dense<0.000000e+00> : vector<8x128xf32>
    %175 = tpu.matmul %172, %174, %cst_73 {dimension_numbers = #tpu.dot_dimension_numbers<[1], [0], [0], [1], [0, 0, 1, 1], [], []>} : vector<8x512xbf16>, vector<512x128xbf16>, vector<8x128xf32> -> vector<8x128xf32>
    %176 = vector.broadcast %21 : vector<1x128xf32> to vector<8x128xf32>
    %177 = arith.addf %175, %176 : vector<8x128xf32>
    %178 = arith.addf %130, %177 : vector<8x128xf32>
    %c0_74 = arith.constant 0 : index
    %c0_75 = arith.constant 0 : index
    %179 = vector.load %arg12[%c0_74, %c0_75] : memref<8x128xf32, #tpu.memory_space<vmem>>, vector<8x128xf32>
    tpu.vector_store %arg12[%c0_74, %c0_75], %178 {strides = array<i32>} : memref<8x128xf32, #tpu.memory_space<vmem>>, vector<8x128xf32>,
    %c1_i32 = arith.constant 1 : i32
    %180 = arith.cmpi eq, %arg1, %c1_i32 : i32
    %181 = arith.extui %180 : i1 to i32
    %c0_i32_76 = arith.constant 0 : i32
    %182 = arith.cmpi ne, %181, %c0_i32_76 : i32
    scf.if %182 {
      %c0_77 = arith.constant 0 : index
      %c0_78 = arith.constant 0 : index
      %183 = vector.load %arg9[%c0_77, %c0_78] : memref<2x128xf32, #tpu.memory_space<vmem>>, vector<1x128xf32>
      %c1_79 = arith.constant 1 : index
      %c0_80 = arith.constant 0 : index
      %184 = vector.load %arg9[%c1_79, %c0_80] : memref<2x128xf32, #tpu.memory_space<vmem>>, vector<1x128xf32>
      %cst_81 = arith.constant dense<0.000000e+00> : vector<8xf32>
      %185 = vector.multi_reduction <add>, %178, %cst_81 [1] : vector<8x128xf32> to vector<8xf32>
      %186 = vector.shape_cast %185 : vector<8xf32> to vector<8x1xf32>
      %cst_82 = arith.constant 1.280000e+02 : f32
      %187 = vector.broadcast %cst_82 : f32 to vector<8x1xf32>
      %188 = arith.divf %186, %187 : vector<8x1xf32>
      %189 = vector.broadcast %188 : vector<8x1xf32> to vector<8x128xf32>
      %190 = arith.subf %178, %189 : vector<8x128xf32>
      %191 = arith.mulf %190, %190 : vector<8x128xf32>
      %cst_83 = arith.constant dense<0.000000e+00> : vector<8xf32>
      %192 = vector.multi_reduction <add>, %191, %cst_83 [1] : vector<8x128xf32> to vector<8xf32>
      %193 = vector.shape_cast %192 : vector<8xf32> to vector<8x1xf32>
      %cst_84 = arith.constant 1.280000e+02 : f32
      %194 = vector.broadcast %cst_84 : f32 to vector<8x1xf32>
      %195 = arith.divf %193, %194 : vector<8x1xf32>
      %196 = vector.broadcast %188 : vector<8x1xf32> to vector<8x128xf32>
      %197 = arith.subf %178, %196 : vector<8x128xf32>
      %cst_85 = arith.constant 9.99999974E-6 : f32
      %198 = vector.broadcast %cst_85 : f32 to vector<8x1xf32>
      %199 = arith.addf %195, %198 : vector<8x1xf32>
      %200 = math.rsqrt %199 : vector<8x1xf32>
      %201 = vector.broadcast %200 : vector<8x1xf32> to vector<8x128xf32>
      %202 = arith.mulf %197, %201 : vector<8x128xf32>
      %203 = vector.broadcast %183 : vector<1x128xf32> to vector<8x128xf32>
      %204 = arith.mulf %202, %203 : vector<8x128xf32>
      %205 = vector.broadcast %184 : vector<1x128xf32> to vector<8x128xf32>
      %206 = arith.addf %204, %205 : vector<8x128xf32>
      %207 = arith.truncf %206 : vector<8x128xf32> to vector<8x128xbf16>
      %c0_86 = arith.constant 0 : index
      %c0_87 = arith.constant 0 : index
      %208 = vector.load %arg10[%c0_86, %c0_87] : memref<128x128xbf16, #tpu.memory_space<vmem>>, vector<128x128xbf16>
      %cst_88 = arith.constant dense<0.000000e+00> : vector<8x128xf32>
      %209 = tpu.matmul %207, %208, %cst_88 {dimension_numbers = #tpu.dot_dimension_numbers<[1], [0], [0], [1], [0, 0, 1, 1], [], []>} : vector<8x128xbf16>, vector<128x128xbf16>, vector<8x128xf32> -> vector<8x128xf32>
      %c0_89 = arith.constant 0 : index
      %c0_90 = arith.constant 0 : index
      %210 = vector.load %arg11[%c0_89, %c0_90] : memref<8x128xf32, #tpu.memory_space<vmem>>, vector<8x128xf32>
      tpu.vector_store %arg11[%c0_89, %c0_90], %209 {strides = array<i32>} : memref<8x128xf32, #tpu.memory_space<vmem>>, vector<8x128xf32>,
    } else {
    }
    return
  }
  func.func @transform_0(%arg0: i32, %arg1: i32) -> (i32, i32) {
    %c0_i32 = arith.constant 0 : i32
    %c0_i32_0 = arith.constant 0 : i32
    return %arg0, %c0_i32 : i32, i32
  }
  func.func @transform_1(%arg0: i32, %arg1: i32) -> (i32, i32, i32) {
    %c0_i32 = arith.constant 0 : i32
    %c0_i32_0 = arith.constant 0 : i32
    %c0_i32_1 = arith.constant 0 : i32
    return %arg0, %c0_i32, %c0_i32_0 : i32, i32, i32
  }
  func.func @transform_2(%arg0: i32, %arg1: i32) -> (i32, i32, i32) {
    %c0_i32 = arith.constant 0 : i32
    %c0_i32_0 = arith.constant 0 : i32
    %c0_i32_1 = arith.constant 0 : i32
    return %arg1, %c0_i32, %c0_i32_0 : i32, i32, i32
  }
  func.func @transform_3(%arg0: i32, %arg1: i32) -> (i32, i32, i32) {
    %c0_i32 = arith.constant 0 : i32
    %c0_i32_0 = arith.constant 0 : i32
    %c0_i32_1 = arith.constant 0 : i32
    return %arg1, %c0_i32, %c0_i32_0 : i32, i32, i32
  }
  func.func @transform_4(%arg0: i32, %arg1: i32) -> (i32, i32, i32) {
    %c0_i32 = arith.constant 0 : i32
    %c0_i32_0 = arith.constant 0 : i32
    %c0_i32_1 = arith.constant 0 : i32
    return %arg1, %c0_i32, %c0_i32_0 : i32, i32, i32
  }
  func.func @transform_5(%arg0: i32, %arg1: i32) -> (i32, i32, i32) {
    %c0_i32 = arith.constant 0 : i32
    %c0_i32_0 = arith.constant 0 : i32
    %c0_i32_1 = arith.constant 0 : i32
    return %arg1, %c0_i32, %c0_i32_0 : i32, i32, i32
  }
  func.func @transform_6(%arg0: i32, %arg1: i32) -> (i32, i32, i32) {
    %c0_i32 = arith.constant 0 : i32
    %c0_i32_0 = arith.constant 0 : i32
    %c0_i32_1 = arith.constant 0 : i32
    return %arg1, %c0_i32, %c0_i32_0 : i32, i32, i32
  }
  func.func @transform_7(%arg0: i32, %arg1: i32) -> (i32, i32) {
    %c0_i32 = arith.constant 0 : i32
    %c0_i32_0 = arith.constant 0 : i32
    %c0_i32_1 = arith.constant 0 : i32
    return %c0_i32, %c0_i32_0 : i32, i32
  }
  func.func @transform_8(%arg0: i32, %arg1: i32) -> (i32, i32) {
    %c0_i32 = arith.constant 0 : i32
    %c0_i32_0 = arith.constant 0 : i32
    %c0_i32_1 = arith.constant 0 : i32
    return %c0_i32, %c0_i32_0 : i32, i32
  }
  func.func @transform_9(%arg0: i32, %arg1: i32) -> (i32, i32) {
    %c0_i32 = arith.constant 0 : i32
    %c0_i32_0 = arith.constant 0 : i32
    return %arg0, %c0_i32 : i32, i32
  }
}

</mosaic_0001>

<llo_original>
// kernel: gpt2_lm_forward.1
$region0: #{gpt2_lm_forward.1}
  #allocation0 [shape = 'u32[]', space=smem, size = 0x4, offset = 0x4, fixed_abs, tag = 'smem constant byte address 0x4 - core index']
  #allocation1 [shape = 'u32[144,128]{1,0:T(1,128)}', space=vmem, size = 0x12000, scoped, tag = 'internal scratch']
  #allocation2 [shape = 'f32[8,128]{1,0:T(8,128)}', space=vmem, size = 0x1000, scoped, tag = 'scratch operand']
  #allocation3 [shape = 'f32[8,128]{1,0:T(8,128)}', space=vmem, size = 0x1000, scoped, tag = 'scratch operand']
  %s0 = inlined_call_operand.vmem [shape: f32[16,128], index: 0, kind: input, shape index: {}]
  %s1 = inlined_call_operand.vmem [shape: f32[2,8,8], index: 1, kind: input, shape index: {}]
  %s2 = inlined_call_operand.vmem [shape: f32[2,8,512], index: 2, kind: input, shape index: {}]
  %s3 = inlined_call_operand.hbm [shape: bf16[2,128,384], index: 3, kind: input, shape index: {}]
  %s4 = inlined_call_operand.vmem [shape: bf16[2,128,128], index: 4, kind: input, shape index: {}]
  %s5 = inlined_call_operand.hbm [shape: bf16[2,128,512], index: 5, kind: input, shape index: {}]
  %s6 = inlined_call_operand.hbm [shape: bf16[2,512,128], index: 6, kind: input, shape index: {}]
  %s7 = inlined_call_operand.hbm [shape: f32[2,128], index: 7, kind: input, shape index: {}]
  %s8 = inlined_call_operand.vmem [shape: bf16[128,128], index: 8, kind: input, shape index: {}]
  %s9 = inlined_call_operand.hbm [shape: f32[16,128], index: 9, kind: output, shape index: {}]
  %s10 = sld [smem:[#allocation0]]
  $region93: #{gpt2_lm_forward.1} parent=0
    _
  %s12 = ssub.s32 1, %s10
  %s13 = scalar_select 0, %s12, %s10
  $region1: #{gpt2_lm_forward.1} parent=0
    #allocation4 [shape = 'u8[196608]{0}', space=vmem, size = 0x30000, scoped, tag = 'input window, operand 3']
    #allocation5 [shape = 's32[2]{0}', space=sflag, size = 0x8, scoped, tag = 'scoped memory for gpt2_lm_forward.1']
    #allocation6 [shape = 's32[2]{0}', space=sflag, size = 0x8, scoped, tag = 'scoped memory for gpt2_lm_forward.1']
    #allocation7 [shape = 'u8[262144]{0}', space=vmem, size = 0x40000, scoped, tag = 'input window, operand 5']
    #allocation8 [shape = 's32[2]{0}', space=sflag, size = 0x8, scoped, tag = 'scoped memory for gpt2_lm_forward.1']
    #allocation9 [shape = 'u8[262144]{0}', space=vmem, size = 0x40000, scoped, tag = 'input window, operand 6']
    #allocation10 [shape = 'u8[1024]{0}', space=vmem, size = 0x400, scoped, tag = 'input window, operand 7, single buffered']
    #allocation11 [shape = 's32[1]{0}', space=sflag, size = 0x4, scoped, tag = 'scoped memory for gpt2_lm_forward.1']
    #allocation12 [shape = 'u8[8192]{0}', space=vmem, size = 0x2000, scoped, tag = 'output window, operand 0']
    %14 = vsyncpa [#allocation5], 0
    %s15 = scalar_lea.sflag [#allocation5], 1
    %16 = vsyncpa %s15, 0
    %17 = vsyncpa [#allocation8], 0
    %s18 = scalar_lea.sflag [#allocation8], 1
    %19 = vsyncpa %s18, 0
    %20 = vsyncpa [#allocation11], 0
    %21 = vsyncpa [#allocation6], 0
    %s22 = scalar_lea.sflag [#allocation6], 1
    %23 = vsyncpa %s22, 0
    loop: start=0, step=1, limit=6
    $region2: #{gpt2_lm_forward.1} parent=1 // loop_pre_header
      _
    $region3: #{gpt2_lm_forward.1} parent=1 // loop_header
      %s25 = sphi 0, %s29
      %p26 = scmp.ge.s32.totalorder %s25, 6
      %s32 = sphi 0, %s44
      %s33 = sphi 0, %s40
      %s34 = sphi 0, %s32
      %s35 = sphi 0, %s33
      %s36 = sphi 0, %s34
      %s37 = sphi 0, %s35
      %s47 = sphi 0, %s49
      %s50 = sphi 0, %s47
      %s51 = sphi 0, %s50
      %s67 = sphi 0, %s51
      %s73 = sphi 0, %s75
      %s76 = sphi 0, %s73
      %s77 = sphi 0, %s76
      %s93 = sphi 0, %s77
      %s99 = sphi 0, %s101
      %s102 = sphi 0, %s99
      %s103 = sphi 0, %s102
      %s119 = sphi 0, %s103
      %s125 = sphi 0, %s127
      %s128 = sphi 0, %s125
      %s129 = sphi 0, %s128
      %s145 = sphi 0, %s129
      %s151 = sphi 0, %s153
      %s154 = sphi 0, %s151
      %s155 = sphi 0, %s154
      %s171 = sphi 0, %s155
      %s177 = sphi 0, %s179
      %s180 = sphi 0, %s177
      %s181 = sphi 0, %s180
      %s197 = sphi 0, %s181
      %s203 = sphi 0, %s205
      %s206 = sphi 0, %s203
      %s207 = sphi 0, %s206
      %s223 = sphi 0, %s207
      %s227 = sphi 0, %s227
      %s229 = sphi 0, %s227
      %s230 = sphi 0, %s229
      %s244 = sphi 0, %s230
      %s248 = sphi 0, %s248
      %s250 = sphi 0, %s248
      %s251 = sphi 0, %s250
      %s265 = sphi 0, %s251
      %s271 = sphi 0, %s273
      %s274 = sphi 0, %s271
      %s275 = sphi 0, %s274
      %s291 = sphi 0, %s275
    $region4: #{gpt2_lm_forward.1} parent=1 // loop_header_branch
      %28 = sbr.rel (%p26) target = $region8
    $region5: #{gpt2_lm_forward.1} parent=1 // loop_body
      %s30 = ssub.s32 %s25, 1
      %s31 = ssub.s32 %s25, 2
      %s38 = sadd.s32 1, %s33
      %p39 = scmp.ge.s32.totalorder %s38, 2
      %s40 = scalar_select %p39, 0, %s38
      %s41 = sadd.s32 1, %s32
      %s42 = scalar_select %p39, %s41, %s32
      %p43 = scmp.ge.s32.totalorder %s42, 2
      %s44 = scalar_select %p43, 0, %s42
      %s45 = ssub.s32 %s32, %s44
      %p46 = scmp.eq.s32.totalorder %s45, 0
      %s48 = sadd.s32 %s47, 1
      %s49 = scalar_select %p46, %s47, %s48
      %p52 = pneg %p46
      %p53 = scmp.eq.s32.totalorder %s25, 3
      %p54 = por %p52, %p53
      %p55 = scmp.ne.s32.totalorder %s47, %s50
      %p56 = scmp.eq.s32.totalorder %s25, 0
      %p57 = por %p55, %p56
      %p58 = scmp.ne.s32.totalorder %s47, %s50
      %p59 = scmp.eq.s32.totalorder %s30, 3
      %p60 = por %p58, %p59
      %p61 = scmp.ne.s32.totalorder %s50, %s51
      %p62 = scmp.eq.s32.totalorder %s30, 0
      %p63 = por %p61, %p62
      %p64 = scmp.ne.s32.totalorder %s50, %s51
      %p65 = scmp.eq.s32.totalorder %s31, 3
      %p66 = por %p64, %p65
      %p68 = scmp.ne.s32.totalorder %s51, %s67
      %p69 = scmp.eq.s32.totalorder %s31, 0
      %p70 = por %p68, %p69
      %s71 = ssub.s32 %s32, %s44
      %p72 = scmp.eq.s32.totalorder %s71, 0
      %s74 = sadd.s32 %s73, 1
      %s75 = scalar_select %p72, %s73, %s74
      %p78 = pneg %p72
      %p79 = scmp.eq.s32.totalorder %s25, 3
      %p80 = por %p78, %p79
      %p81 = scmp.ne.s32.totalorder %s73, %s76
      %p82 = scmp.eq.s32.totalorder %s25, 0
      %p83 = por %p81, %p82
      %p84 = scmp.ne.s32.totalorder %s73, %s76
      %p85 = scmp.eq.s32.totalorder %s30, 3
      %p86 = por %p84, %p85
      %p87 = scmp.ne.s32.totalorder %s76, %s77
      %p88 = scmp.eq.s32.totalorder %s30, 0
      %p89 = por %p87, %p88
      %p90 = scmp.ne.s32.totalorder %s76, %s77
      %p91 = scmp.eq.s32.totalorder %s31, 3
      %p92 = por %p90, %p91
      %p94 = scmp.ne.s32.totalorder %s77, %s93
      %p95 = scmp.eq.s32.totalorder %s31, 0
      %p96 = por %p94, %p95
      %s97 = ssub.s32 %s33, %s40
      %p98 = scmp.eq.s32.totalorder %s97, 0
      %s100 = sadd.s32 %s99, 1
      %s101 = scalar_select %p98, %s99, %s100
      %p104 = pneg %p98
      %p105 = scmp.eq.s32.totalorder %s25, 3
      %p106 = por %p104, %p105
      %p107 = scmp.ne.s32.totalorder %s99, %s102
      %p108 = scmp.eq.s32.totalorder %s25, 0
      %p109 = por %p107, %p108
      %p110 = scmp.ne.s32.totalorder %s99, %s102
      %p111 = scmp.eq.s32.totalorder %s30, 3
      %p112 = por %p110, %p111
      %p113 = scmp.ne.s32.totalorder %s102, %s103
      %p114 = scmp.eq.s32.totalorder %s30, 0
      %p115 = por %p113, %p114
      %p116 = scmp.ne.s32.totalorder %s102, %s103
      %p117 = scmp.eq.s32.totalorder %s31, 3
      %p118 = por %p116, %p117
      %p120 = scmp.ne.s32.totalorder %s103, %s119
      %p121 = scmp.eq.s32.totalorder %s31, 0
      %p122 = por %p120, %p121
      %s123 = ssub.s32 %s33, %s40
      %p124 = scmp.eq.s32.totalorder %s123, 0
      %s126 = sadd.s32 %s125, 1
      %s127 = scalar_select %p124, %s125, %s126
      %p130 = pneg %p124
      %p131 = scmp.eq.s32.totalorder %s25, 3
      %p132 = por %p130, %p131
      %p133 = scmp.ne.s32.totalorder %s125, %s128
      %p134 = scmp.eq.s32.totalorder %s25, 0
      %p135 = por %p133, %p134
      %p136 = scmp.ne.s32.totalorder %s125, %s128
      %p137 = scmp.eq.s32.totalorder %s30, 3
      %p138 = por %p136, %p137
      %p139 = scmp.ne.s32.totalorder %s128, %s129
      %p140 = scmp.eq.s32.totalorder %s30, 0
      %p141 = por %p139, %p140
      %p142 = scmp.ne.s32.totalorder %s128, %s129
      %p143 = scmp.eq.s32.totalorder %s31, 3
      %p144 = por %p142, %p143
      %p146 = scmp.ne.s32.totalorder %s129, %s145
      %p147 = scmp.eq.s32.totalorder %s31, 0
      %p148 = por %p146, %p147
      %s149 = ssub.s32 %s33, %s40
      %p150 = scmp.eq.s32.totalorder %s149, 0
      %s152 = sadd.s32 %s151, 1
      %s153 = scalar_select %p150, %s151, %s152
      %p156 = pneg %p150
      %p157 = scmp.eq.s32.totalorder %s25, 3
      %p158 = por %p156, %p157
      %p159 = scmp.ne.s32.totalorder %s151, %s154
      %p160 = scmp.eq.s32.totalorder %s25, 0
      %p161 = por %p159, %p160
      %p162 = scmp.ne.s32.totalorder %s151, %s154
      %p163 = scmp.eq.s32.totalorder %s30, 3
      %p164 = por %p162, %p163
      %p165 = scmp.ne.s32.totalorder %s154, %s155
      %p166 = scmp.eq.s32.totalorder %s30, 0
      %p167 = por %p165, %p166
      %p168 = scmp.ne.s32.totalorder %s154, %s155
      %p169 = scmp.eq.s32.totalorder %s31, 3
      %p170 = por %p168, %p169
      %p172 = scmp.ne.s32.totalorder %s155, %s171
      %p173 = scmp.eq.s32.totalorder %s31, 0
      %p174 = por %p172, %p173
      %s175 = ssub.s32 %s33, %s40
      %p176 = scmp.eq.s32.totalorder %s175, 0
      %s178 = sadd.s32 %s177, 1
      %s179 = scalar_select %p176, %s177, %s178
      %p182 = pneg %p176
      %p183 = scmp.eq.s32.totalorder %s25, 3
      %p184 = por %p182, %p183
      %p185 = scmp.ne.s32.totalorder %s177, %s180
      %p186 = scmp.eq.s32.totalorder %s25, 0
      %p187 = por %p185, %p186
      %p188 = scmp.ne.s32.totalorder %s177, %s180
      %p189 = scmp.eq.s32.totalorder %s30, 3
      %p190 = por %p188, %p189
      %p191 = scmp.ne.s32.totalorder %s180, %s181
      %p192 = scmp.eq.s32.totalorder %s30, 0
      %p193 = por %p191, %p192
      %p194 = scmp.ne.s32.totalorder %s180, %s181
      %p195 = scmp.eq.s32.totalorder %s31, 3
      %p196 = por %p194, %p195
      %p198 = scmp.ne.s32.totalorder %s181, %s197
      %p199 = scmp.eq.s32.totalorder %s31, 0
      %p200 = por %p198, %p199
      %s201 = ssub.s32 %s33, %s40
      %p202 = scmp.eq.s32.totalorder %s201, 0
      %s204 = sadd.s32 %s203, 1
      %s205 = scalar_select %p202, %s203, %s204
      %p208 = pneg %p202
      %p209 = scmp.eq.s32.totalorder %s25, 3
      %p210 = por %p208, %p209
      %p211 = scmp.ne.s32.totalorder %s203, %s206
      %p212 = scmp.eq.s32.totalorder %s25, 0
      %p213 = por %p211, %p212
      %p214 = scmp.ne.s32.totalorder %s203, %s206
      %p215 = scmp.eq.s32.totalorder %s30, 3
      %p216 = por %p214, %p215
      %p217 = scmp.ne.s32.totalorder %s206, %s207
      %p218 = scmp.eq.s32.totalorder %s30, 0
      %p219 = por %p217, %p218
      %p220 = scmp.ne.s32.totalorder %s206, %s207
      %p221 = scmp.eq.s32.totalorder %s31, 3
      %p222 = por %p220, %p221
      %p224 = scmp.ne.s32.totalorder %s207, %s223
      %p225 = scmp.eq.s32.totalorder %s31, 0
      %p226 = por %p224, %p225
      %s228 = sadd.s32 %s227, 1
      %p231 = scmp.eq.s32.totalorder %s25, 3
      %p232 = scmp.ne.s32.totalorder %s227, %s229
      %p233 = scmp.eq.s32.totalorder %s25, 0
      %p234 = por %p232, %p233
      %p235 = scmp.ne.s32.totalorder %s227, %s229
      %p236 = scmp.eq.s32.totalorder %s30, 3
      %p237 = por %p235, %p236
      %p238 = scmp.ne.s32.totalorder %s229, %s230
      %p239 = scmp.eq.s32.totalorder %s30, 0
      %p240 = por %p238, %p239
      %p241 = scmp.ne.s32.totalorder %s229, %s230
      %p242 = scmp.eq.s32.totalorder %s31, 3
      %p243 = por %p241, %p242
      %p245 = scmp.ne.s32.totalorder %s230, %s244
      %p246 = scmp.eq.s32.totalorder %s31, 0
      %p247 = por %p245, %p246
      %s249 = sadd.s32 %s248, 1
      %p252 = scmp.eq.s32.totalorder %s25, 3
      %p253 = scmp.ne.s32.totalorder %s248, %s250
      %p254 = scmp.eq.s32.totalorder %s25, 0
      %p255 = por %p253, %p254
      %p256 = scmp.ne.s32.totalorder %s248, %s250
      %p257 = scmp.eq.s32.totalorder %s30, 3
      %p258 = por %p256, %p257
      %p259 = scmp.ne.s32.totalorder %s250, %s251
      %p260 = scmp.eq.s32.totalorder %s30, 0
      %p261 = por %p259, %p260
      %p262 = scmp.ne.s32.totalorder %s250, %s251
      %p263 = scmp.eq.s32.totalorder %s31, 3
      %p264 = por %p262, %p263
      %p266 = scmp.ne.s32.totalorder %s251, %s265
      %p267 = scmp.eq.s32.totalorder %s31, 0
      %p268 = por %p266, %p267
      %s269 = ssub.s32 %s32, %s44
      %p270 = scmp.eq.s32.totalorder %s269, 0
      %s272 = sadd.s32 %s271, 1
      %s273 = scalar_select %p270, %s271, %s272
      %p276 = pneg %p270
      %p277 = scmp.eq.s32.totalorder %s25, 3
      %p278 = por %p276, %p277
      %p279 = scmp.ne.s32.totalorder %s271, %s274
      %p280 = scmp.eq.s32.totalorder %s25, 0
      %p281 = por %p279, %p280
      %p282 = scmp.ne.s32.totalorder %s271, %s274
      %p283 = scmp.eq.s32.totalorder %s30, 3
      %p284 = por %p282, %p283
      %p285 = scmp.ne.s32.totalorder %s274, %s275
      %p286 = scmp.eq.s32.totalorder %s30, 0
      %p287 = por %p285, %p286
      %p288 = scmp.ne.s32.totalorder %s274, %s275
      %p289 = scmp.eq.s32.totalorder %s31, 3
      %p290 = por %p288, %p289
      %p292 = scmp.ne.s32.totalorder %s275, %s291
      %p293 = scmp.eq.s32.totalorder %s31, 0
      %p294 = por %p292, %p293
      %p295 = scmp.le.s32.totalorder 1, %s25
      %p296 = scmp.lt.s32.totalorder %s25, 5
      %p297 = pnand %p295, %p296
      %p298 = pneg %p297
      // Predicated region
      $region9: #{gpt2_lm_forward.1} parent=5 // pred_check
        _
      $region10: #{gpt2_lm_forward.1} parent=5 // pred_check_branch
        %300 = sbr.rel (%p297) target = $region12
      $region11: #{gpt2_lm_forward.1} parent=5 // pred_region
        %s301 = ssub.s32 %s25, 1
        // Predicated region
        $region13: #{gpt2_lm_forward.1} parent=11 // pred_check
          %p302 = pneg %p240
        $region14: #{gpt2_lm_forward.1} parent=11 // pred_check_branch
          %304 = sbr.rel (%p302) target = $region16
        $region15: #{gpt2_lm_forward.1} parent=11 // pred_region
          %s306 = ssub.s32 32, 32
          %307 = vsyncadd [#allocation11], %s306
          %s309 = sshll.u32 [#allocation10], 4
          %s310 = int_to_ptr.vmem [resolvable:$true] %s309
          %312 = dma.hbm_to_vmem [thread:$0]  %s7, 32, %s310, [#allocation11]
        $region16: #{gpt2_lm_forward.1} parent=11 // pred_fallthru
          _
        // Predicated region
        $region17: #{gpt2_lm_forward.1} parent=11 // pred_check
          %p313 = pneg %p261
        $region18: #{gpt2_lm_forward.1} parent=11 // pred_check_branch
          %315 = sbr.rel (%p313) target = $region20
        $region19: #{gpt2_lm_forward.1} parent=11 // pred_region
          _
        $region20: #{gpt2_lm_forward.1} parent=11 // pred_fallthru
          _
      $region12: #{gpt2_lm_forward.1} parent=5 // pred_fallthru
        _
      %p316 = scmp.lt.s32.totalorder %s25, 4
      // Predicated region
      $region21: #{gpt2_lm_forward.1} parent=5 // pred_check
        %p317 = pneg %p316
      $region22: #{gpt2_lm_forward.1} parent=5 // pred_check_branch
        %319 = sbr.rel (%p317) target = $region24
      $region23: #{gpt2_lm_forward.1} parent=5 // pred_region
        // Predicated region
        $region25: #{gpt2_lm_forward.1} parent=23 // pred_check
          %p320 = pneg %p57
        $region26: #{gpt2_lm_forward.1} parent=23 // pred_check_branch
          %322 = sbr.rel (%p320) target = $region28
        $region27: #{gpt2_lm_forward.1} parent=23 // pred_region
          %p323 = scmp.lt.s32.totalorder %s32, 1
          %s324 = scalar_select %p323, %s32, 1
          %s325 = smul.addr %s324, 8
          %s326 = scalar_lea.vmem %s0, %s325
        $region28: #{gpt2_lm_forward.1} parent=23 // pred_fallthru
          _
        // Predicated region
        $region29: #{gpt2_lm_forward.1} parent=23 // pred_check
          %p327 = pneg %p83
        $region30: #{gpt2_lm_forward.1} parent=23 // pred_check_branch
          %329 = sbr.rel (%p327) target = $region32
        $region31: #{gpt2_lm_forward.1} parent=23 // pred_region
          %p330 = scmp.lt.s32.totalorder %s32, 1
          %s331 = scalar_select %p330, %s32, 1
          %s332 = smul.addr %s331, 8
          %s333 = scalar_lea.vmem %s1, %s332
        $region32: #{gpt2_lm_forward.1} parent=23 // pred_fallthru
          _
        // Predicated region
        $region33: #{gpt2_lm_forward.1} parent=23 // pred_check
          %p334 = pneg %p109
        $region34: #{gpt2_lm_forward.1} parent=23 // pred_check_branch
          %336 = sbr.rel (%p334) target = $region36
        $region35: #{gpt2_lm_forward.1} parent=23 // pred_region
          %p337 = scmp.lt.s32.totalorder %s33, 1
          %s338 = scalar_select %p337, %s33, 1
          %s339 = smul.addr %s338, 4
          %s340 = smul.addr %s339, 8
          %s341 = scalar_lea.vmem %s2, %s340
        $region36: #{gpt2_lm_forward.1} parent=23 // pred_fallthru
          _
        // Predicated region
        $region37: #{gpt2_lm_forward.1} parent=23 // pred_check
          %p342 = pneg %p135
        $region38: #{gpt2_lm_forward.1} parent=23 // pred_check_branch
          %344 = sbr.rel (%p342) target = $region40
        $region39: #{gpt2_lm_forward.1} parent=23 // pred_region
          %s345 = sand.u32 %s125, 1
          %s346 = scalar_lea.sflag [#allocation5], %s345
          %s347 = sand.u32 %s125, 1
          %s348 = smul.addr %s347, 192
          %s349 = scalar_lea.vmem [#allocation4], %s348
          %s351 = ssub.s32 3072, 3072
          %352 = vsyncadd %s346, %s351
          %s353 = smul.addr %s33, 48
          %s354 = smul.addr %s353, 64
          %s355 = scalar_lea.hbm %s3, %s354
          %s356 = sshll.u32 %s349, 4
          %s357 = int_to_ptr.vmem [resolvable:$true] %s356
          %362 = dma.hbm_to_vmem [thread:$0]  %s355, 3072, %s357, %s346, 192, 192, 12
        $region40: #{gpt2_lm_forward.1} parent=23 // pred_fallthru
          _
        // Predicated region
        $region41: #{gpt2_lm_forward.1} parent=23 // pred_check
          %p363 = pneg %p161
        $region42: #{gpt2_lm_forward.1} parent=23 // pred_check_branch
          %365 = sbr.rel (%p363) target = $region44
        $region43: #{gpt2_lm_forward.1} parent=23 // pred_region
          %p366 = scmp.lt.s32.totalorder %s33, 1
          %s367 = scalar_select %p366, %s33, 1
          %s368 = smul.addr %s367, 16
          %s369 = smul.addr %s368, 4
          %s370 = scalar_lea.vmem %s4, %s369
        $region44: #{gpt2_lm_forward.1} parent=23 // pred_fallthru
          _
        // Predicated region
        $region45: #{gpt2_lm_forward.1} parent=23 // pred_check
          %p371 = pneg %p187
        $region46: #{gpt2_lm_forward.1} parent=23 // pred_check_branch
          %373 = sbr.rel (%p371) target = $region48
        $region47: #{gpt2_lm_forward.1} parent=23 // pred_region
          %s374 = sand.u32 %s25, 1
          %s375 = scalar_lea.sflag [#allocation8], %s374
          %s376 = sand.u32 %s177, 1
          %s377 = smul.addr %s376, 256
          %s378 = scalar_lea.vmem [#allocation7], %s377
          %s380 = ssub.s32 4096, 4096
          %381 = vsyncadd %s375, %s380
          %s382 = smul.addr %s33, 64
          %s383 = smul.addr %s382, 64
          %s384 = scalar_lea.hbm %s5, %s383
          %s385 = sshll.u32 %s378, 4
          %s386 = int_to_ptr.vmem [resolvable:$true] %s385
          %391 = dma.hbm_to_vmem [thread:$0]  %s384, 4096, %s386, %s375, 256, 256, 16
        $region48: #{gpt2_lm_forward.1} parent=23 // pred_fallthru
          _
        // Predicated region
        $region49: #{gpt2_lm_forward.1} parent=23 // pred_check
          %p392 = pneg %p213
        $region50: #{gpt2_lm_forward.1} parent=23 // pred_check_branch
          %394 = sbr.rel (%p392) target = $region52
        $region51: #{gpt2_lm_forward.1} parent=23 // pred_region
          %s395 = sand.u32 %s25, 1
          %s396 = scalar_lea.sflag [#allocation8], %s395
          %s397 = sand.u32 %s203, 1
          %s398 = smul.addr %s397, 256
          %s399 = scalar_lea.vmem [#allocation9], %s398
          %s401 = ssub.s32 4096, 4096
          %402 = vsyncadd %s396, %s401
          %s403 = smul.addr %s33, 64
          %s404 = smul.addr %s403, 64
          %s405 = scalar_lea.hbm %s6, %s404
          %s406 = sshll.u32 %s399, 4
          %s407 = int_to_ptr.vmem [resolvable:$true] %s406
          %412 = dma.hbm_to_vmem [thread:$0]  %s405, 4096, %s407, %s396, 64, 64, 4
        $region52: #{gpt2_lm_forward.1} parent=23 // pred_fallthru
          _
      $region24: #{gpt2_lm_forward.1} parent=5 // pred_fallthru
        _
      %p413 = scmp.le.s32.totalorder 1, %s25
      %p414 = scmp.lt.s32.totalorder %s25, 5
      %p415 = pnand %p413, %p414
      %p416 = pneg %p415
      // Predicated region
      $region53: #{gpt2_lm_forward.1} parent=5 // pred_check
        _
      $region54: #{gpt2_lm_forward.1} parent=5 // pred_check_branch
        %418 = sbr.rel (%p415) target = $region56
      $region55: #{gpt2_lm_forward.1} parent=5 // pred_region
        %s419 = ssub.s32 %s25, 1
        %s420 = sand.u32 %s128, 1
        %s421 = scalar_lea.sflag [#allocation5], %s420
        %s422 = sand.u32 %s128, 1
        %s423 = smul.addr %s422, 192
        %s424 = scalar_lea.vmem [#allocation4], %s423
        // Predicated region
        $region57: #{gpt2_lm_forward.1} parent=55 // pred_check
          %p425 = pneg %p141
        $region58: #{gpt2_lm_forward.1} parent=55 // pred_check_branch
          %427 = sbr.rel (%p425) target = $region60
        $region59: #{gpt2_lm_forward.1} parent=55 // pred_region
          %428 = dma.done %s421, 3072
        $region60: #{gpt2_lm_forward.1} parent=55 // pred_fallthru
          _
        %s429 = sand.u32 %s30, 1
        %s430 = scalar_lea.sflag [#allocation8], %s429
        %s431 = sand.u32 %s180, 1
        %s432 = smul.addr %s431, 256
        %s433 = scalar_lea.vmem [#allocation7], %s432
        // Predicated region
        $region61: #{gpt2_lm_forward.1} parent=55 // pred_check
          %p434 = pneg %p193
        $region62: #{gpt2_lm_forward.1} parent=55 // pred_check_branch
          %436 = sbr.rel (%p434) target = $region64
        $region63: #{gpt2_lm_forward.1} parent=55 // pred_region
          %437 = dma.done %s430, 4096
        $region64: #{gpt2_lm_forward.1} parent=55 // pred_fallthru
          _
        %s438 = sand.u32 %s30, 1
        %s439 = scalar_lea.sflag [#allocation8], %s438
        %s440 = sand.u32 %s206, 1
        %s441 = smul.addr %s440, 256
        %s442 = scalar_lea.vmem [#allocation9], %s441
        // Predicated region
        $region65: #{gpt2_lm_forward.1} parent=55 // pred_check
          %p443 = pneg %p219
        $region66: #{gpt2_lm_forward.1} parent=55 // pred_check_branch
          %445 = sbr.rel (%p443) target = $region68
        $region67: #{gpt2_lm_forward.1} parent=55 // pred_region
          %446 = dma.done %s439, 4096
        $region68: #{gpt2_lm_forward.1} parent=55 // pred_fallthru
          _
        // Predicated region
        $region69: #{gpt2_lm_forward.1} parent=55 // pred_check
          %p447 = pneg %p240
        $region70: #{gpt2_lm_forward.1} parent=55 // pred_check_branch
          %449 = sbr.rel (%p447) target = $region72
        $region71: #{gpt2_lm_forward.1} parent=55 // pred_region
          %450 = dma.done [#allocation11], 32
        $region72: #{gpt2_lm_forward.1} parent=55 // pred_fallthru
          _
        %p451 = scmp.lt.s32.totalorder %s34, 1
        %s452 = scalar_select %p451, %s34, 1
        %s453 = smul.addr %s452, 8
        %s454 = scalar_lea.vmem %s0, %s453
        %p455 = pneg %p63
        %p456 = pneg %p60
        %p457 = scmp.lt.s32.totalorder %s34, 1
        %s458 = scalar_select %p457, %s34, 1
        %s459 = smul.addr %s458, 8
        %s460 = scalar_lea.vmem %s1, %s459
        %p461 = pneg %p89
        %p462 = pneg %p86
        %p463 = scmp.lt.s32.totalorder %s35, 1
        %s464 = scalar_select %p463, %s35, 1
        %s465 = smul.addr %s464, 4
        %s466 = smul.addr %s465, 8
        %s467 = scalar_lea.vmem %s2, %s466
        %p468 = pneg %p115
        %p469 = pneg %p112
        %s470 = sand.u32 %s128, 1
        %s471 = scalar_lea.sflag [#allocation5], %s470
        %s472 = sand.u32 %s128, 1
        %s473 = smul.addr %s472, 192
        %s474 = scalar_lea.vmem [#allocation4], %s473
        %p475 = pneg %p141
        %p476 = pneg %p138
        %p477 = scmp.lt.s32.totalorder %s35, 1
        %s478 = scalar_select %p477, %s35, 1
        %s479 = smul.addr %s478, 16
        %s480 = smul.addr %s479, 4
        %s481 = scalar_lea.vmem %s4, %s480
        %p482 = pneg %p167
        %p483 = pneg %p164
        %s484 = sand.u32 %s30, 1
        %s485 = scalar_lea.sflag [#allocation8], %s484
        %s486 = sand.u32 %s180, 1
        %s487 = smul.addr %s486, 256
        %s488 = scalar_lea.vmem [#allocation7], %s487
        %p489 = pneg %p193
        %p490 = pneg %p190
        %s491 = sand.u32 %s30, 1
        %s492 = scalar_lea.sflag [#allocation8], %s491
        %s493 = sand.u32 %s206, 1
        %s494 = smul.addr %s493, 256
        %s495 = scalar_lea.vmem [#allocation9], %s494
        %p496 = pneg %p219
        %p497 = pneg %p216
        %p498 = pneg %p240
        %p499 = pneg %p237
        %p500 = pneg %p261
        %p501 = pneg %p258
        %p502 = pneg %p287
        %p503 = pneg %p284
        %s504 = sand.u32 %s274, 1
        %s505 = scalar_lea.sflag [#allocation6], %s504
        %s506 = sand.u32 %s274, 1
        %s507 = smul.addr %s506, 8
        %s508 = scalar_lea.vmem [#allocation12], %s507
        %p509 = scmp.lt.s32.totalorder %s34, 1
        %s510 = scalar_select %p509, %s34, 1
        %s511 = smul.addr %s510, 8
        %s512 = scalar_lea.vmem %s0, %s511
        %p513 = scmp.lt.s32.totalorder %s34, 1
        %s514 = scalar_select %p513, %s34, 1
        %s515 = smul.addr %s514, 8
        %s516 = scalar_lea.vmem %s1, %s515
        %p517 = scmp.lt.s32.totalorder %s35, 1
        %s518 = scalar_select %p517, %s35, 1
        %s519 = smul.addr %s518, 4
        %s520 = smul.addr %s519, 8
        %s521 = scalar_lea.vmem %s2, %s520
        %p522 = scmp.lt.s32.totalorder %s35, 1
        %s523 = scalar_select %p522, %s35, 1
        %s524 = smul.addr %s523, 16
        %s525 = smul.addr %s524, 4
        %s526 = scalar_lea.vmem %s4, %s525
        %p528 = scmp.eq.s32.totalorder %s35, 0
        // Predicated region
        $region73: #{gpt2_lm_forward.1} parent=55 // pred_check
          %p529 = pneg %p528
        $region74: #{gpt2_lm_forward.1} parent=55 // pred_check_branch
          %531 = sbr.rel (%p529) target = $region76
        $region75: #{gpt2_lm_forward.1} parent=55 // pred_region
          %v532 = vld [vmem:[%s512] sm:$0xff]
          %533 = vst [vmem:[#allocation2] sm:$0xff] %v532
        $region76: #{gpt2_lm_forward.1} parent=55 // pred_fallthru
          _
        %v534 = vld [vmem:[#allocation2] sm:$0xff]
        %v535 = vld [vmem:[%s516] sm:$0xff]
        %v536 = vld [vmem:[%s521] ss:$0 sm:$0xff]
        %v537 = vld [vmem:[%s521 + $0x1] ss:$0 sm:$0xff]
        %v538 = vld [vmem:[%s521 + $0x2] ss:$0 sm:$0xff]
        %v539 = vld [vmem:[%s521 + $0x3] ss:$0 sm:$0xff]
        %s540 = scalar_lea.vmem %s521, 4
        %v541 = vld [vmem:[%s540] ss:$8 sm:$0x7]
        %v542 = vld [vmem:[%s521 + $0x5] ss:$0 sm:$0xff]
        %s543 = scalar_lea.vmem %s521, 6
        %v544 = vld [vmem:[%s543] ss:$8 sm:$0xf]
        %v545 = vld [vmem:[%s521 + $0x7] ss:$0 sm:$0xff]
        %546 = vadd.xlane.f32.xlu0 %v534
        %v547 = vpop.xlane.xlu0 %546
        %v548 = vrcp.pop 128.0
        %v549 = vmul.f32 %v547, %v548
        %v550 = vsub.f32 %v534, %v549
        %v551 = vmul.f32 %v550, %v550
        %552 = vadd.xlane.f32.xlu0 %v551
        %v553 = vpop.xlane.xlu0 %552
        %v554 = vmul.f32 %v553, %v548
        %v555 = vadd.f32 %v554, 1e-05
        %v556 = vrsqrt.pop %v555
        %v557 = vmul.f32 %v550, %v556
        %v558 = vmul.f32 %v557, %v536
        %v559 = vadd.f32 %v558, %v537
        %v560 = vpack.c.bf16 %v559, %v559
        %v561 = vld [vmem:[%s424] sm:$0xff]
        %v562 = vld [vmem:[%s424 + $0x8] sm:$0xf]
        %v563 = vld [vmem:[%s424 + $0xc] sm:$0xff]
        %v564 = vld [vmem:[%s424 + $0x14] sm:$0xf]
        %v565 = vld [vmem:[%s424 + $0x18] sm:$0xff]
        %v566 = vld [vmem:[%s424 + $0x20] sm:$0xf]
        %v567 = vld [vmem:[%s424 + $0x24] sm:$0xff]
        %v568 = vld [vmem:[%s424 + $0x2c] sm:$0xf]
        %v569 = vld [vmem:[%s424 + $0x30] sm:$0xff]
        %v570 = vld [vmem:[%s424 + $0x38] sm:$0xf]
        %v571 = vld [vmem:[%s424 + $0x3c] sm:$0xff]
        %v572 = vld [vmem:[%s424 + $0x44] sm:$0xf]
        %v573 = vld [vmem:[%s424 + $0x48] sm:$0xff]
        %v574 = vld [vmem:[%s424 + $0x50] sm:$0xf]
        %v575 = vld [vmem:[%s424 + $0x54] sm:$0xff]
        %v576 = vld [vmem:[%s424 + $0x5c] sm:$0xf]
        %v577 = vld [vmem:[%s424 + $0x60] sm:$0xff]
        %v578 = vld [vmem:[%s424 + $0x68] sm:$0xf]
        %v579 = vld [vmem:[%s424 + $0x6c] sm:$0xff]
        %v580 = vld [vmem:[%s424 + $0x74] sm:$0xf]
        %v581 = vld [vmem:[%s424 + $0x78] sm:$0xff]
        %v582 = vld [vmem:[%s424 + $0x80] sm:$0xf]
        %v583 = vld [vmem:[%s424 + $0x84] sm:$0xff]
        %v584 = vld [vmem:[%s424 + $0x8c] sm:$0xf]
        %v585 = vld [vmem:[%s424 + $0x90] sm:$0xff]
        %v586 = vld [vmem:[%s424 + $0x98] sm:$0xf]
        %v587 = vld [vmem:[%s424 + $0x9c] sm:$0xff]
        %v588 = vld [vmem:[%s424 + $0xa4] sm:$0xf]
        %v589 = vld [vmem:[%s424 + $0xa8] sm:$0xff]
        %v590 = vld [vmem:[%s424 + $0xb0] sm:$0xf]
        %v591 = vld [vmem:[%s424 + $0xb4] sm:$0xff]
        %v592 = vld [vmem:[%s424 + $0xbc] sm:$0xf]
        %v594 = vlaneseq
        %v595 = vshrl.u32 %v594, 7
        %v596 = vsub.s32 0, %v595
        %v597 = vrot.slane %v541, %v596
        %v598 = vlaneseq
        %v599 = vshrl.u32 %v598, 7
        %v600 = vsub.s32 1, %v599
        %v601 = vrot.slane %v541, %v600
        %v602 = vlaneseq
        %v603 = vshrl.u32 %v602, 7
        %v604 = vsub.s32 2, %v603
        %v605 = vrot.slane %v541, %v604
        %v641 = vunpack.c.l.b16 %v561
        %v642 = vunpack.c.h.b16 %v561
        %v643 = vunpack.c.l.b16 %v562
        %v644 = vunpack.c.l.b16 %v563
        %v645 = vunpack.c.h.b16 %v563
        %v646 = vunpack.c.l.b16 %v564
        %v647 = vunpack.c.l.b16 %v565
        %v648 = vunpack.c.h.b16 %v565
        %v649 = vunpack.c.l.b16 %v566
        %v650 = vunpack.c.l.b16 %v567
        %v651 = vunpack.c.h.b16 %v567
        %v652 = vunpack.c.l.b16 %v568
        %v653 = vunpack.c.l.b16 %v569
        %v654 = vunpack.c.h.b16 %v569
        %v655 = vunpack.c.l.b16 %v570
        %v656 = vunpack.c.l.b16 %v571
        %v657 = vunpack.c.h.b16 %v571
        %v658 = vunpack.c.l.b16 %v572
        %v659 = vunpack.c.l.b16 %v573
        %v660 = vunpack.c.h.b16 %v573
        %v661 = vunpack.c.l.b16 %v574
        %v662 = vunpack.c.l.b16 %v575
        %v663 = vunpack.c.h.b16 %v575
        %v664 = vunpack.c.l.b16 %v576
        %v665 = vunpack.c.l.b16 %v577
        %v666 = vunpack.c.h.b16 %v577
        %v667 = vunpack.c.l.b16 %v578
        %v668 = vunpack.c.l.b16 %v579
        %v669 = vunpack.c.h.b16 %v579
        %v670 = vunpack.c.l.b16 %v580
        %v671 = vunpack.c.l.b16 %v581
        %v672 = vunpack.c.h.b16 %v581
        %v673 = vunpack.c.l.b16 %v582
        %v674 = vunpack.c.l.b16 %v583
        %v675 = vunpack.c.h.b16 %v583
        %v676 = vunpack.c.l.b16 %v584
        %v677 = vunpack.c.l.b16 %v585
        %v678 = vunpack.c.h.b16 %v585
        %v679 = vunpack.c.l.b16 %v586
        %v680 = vunpack.c.l.b16 %v587
        %v681 = vunpack.c.h.b16 %v587
        %v682 = vunpack.c.l.b16 %v588
        %v683 = vunpack.c.l.b16 %v589
        %v684 = vunpack.c.h.b16 %v589
        %v685 = vunpack.c.l.b16 %v590
        %v686 = vunpack.c.l.b16 %v591
        %v687 = vunpack.c.h.b16 %v591
        %v688 = vunpack.c.l.b16 %v592
        %v689 = vpack.c.b16 %v644, %v641
        %v690 = vpack.c.b16 %v645, %v642
        %v691 = vpack.c.b16 %v646, %v643
        %v692 = vpack.c.b16 %v650, %v647
        %v693 = vpack.c.b16 %v651, %v648
        %v694 = vpack.c.b16 %v652, %v649
        %v695 = vpack.c.b16 %v656, %v653
        %v696 = vpack.c.b16 %v657, %v654
        %v697 = vpack.c.b16 %v658, %v655
        %v698 = vpack.c.b16 %v662, %v659
        %v699 = vpack.c.b16 %v663, %v660
        %v700 = vpack.c.b16 %v664, %v661
        %v701 = vpack.c.b16 %v668, %v665
        %v702 = vpack.c.b16 %v669, %v666
        %v703 = vpack.c.b16 %v670, %v667
        %v704 = vpack.c.b16 %v674, %v671
        %v705 = vpack.c.b16 %v675, %v672
        %v706 = vpack.c.b16 %v676, %v673
        %v707 = vpack.c.b16 %v680, %v677
        %v708 = vpack.c.b16 %v681, %v678
        %v709 = vpack.c.b16 %v682, %v679
        %v710 = vpack.c.b16 %v686, %v683
        %v711 = vpack.c.b16 %v687, %v684
        %v712 = vpack.c.b16 %v688, %v685
        %737 = vmatprep.subr.bf16.mxu0 %v711
        %738 = vmatpush1.bf16.msra.mxu0 %v710
        %739 = vmatprep.subr.bf16.mxu0 %v708
        %740 = vmatpush1.bf16.msra.mxu0 %v707
        %741 = vmatprep.subr.bf16.mxu0 %v705
        %742 = vmatpush1.bf16.msra.mxu0 %v704
        %743 = vmatprep.subr.bf16.mxu0 %v702
        %744 = vmatpush1.bf16.msra.mxu0 %v701
        %745 = vmatprep.subr.bf16.mxu0 %v699
        %746 = vmatpush1.bf16.msra.mxu0 %v698
        %747 = vmatprep.subr.bf16.mxu0 %v696
        %748 = vmatpush1.bf16.msra.mxu0 %v695
        %749 = vmatprep.subr.bf16.mxu0 %v693
        %750 = vmatpush1.bf16.msra.mxu0 %v692
        %751 = vmatprep.subr.bf16.mxu0 %v690
        %752 = vmatpush1.bf16.msra.mxu0 %v689
        %753 = vmatprep.subr.bf16.mxu0 0
        %754 = vmatpush2.bf16.msra.mxu0 0
        %755 = vmatprep.subr.bf16.mxu0 0
        %756 = vmatpush2.bf16.msra.mxu0 0
        %757 = vmatprep.subr.bf16.mxu0 0
        %758 = vmatpush2.bf16.msra.mxu0 0
        %759 = vmatprep.subr.bf16.mxu0 0
        %760 = vmatpush2.bf16.msra.mxu0 0
        %761 = vmatprep.subr.bf16.mxu0 0
        %762 = vmatpush2.bf16.msra.mxu0 0
        %763 = vmatprep.subr.bf16.mxu0 0
        %764 = vmatpush2.bf16.msra.mxu0 0
        %765 = vmatprep.subr.bf16.mxu0 0
        %766 = vmatpush2.bf16.msra.mxu0 0
        %767 = vmatprep.subr.bf16.mxu0 0
        %768 = vmatpush2.bf16.msra.mxu0 0
        %769 = vmatprep.mubr.bf16.mxu0 0
        %770 = vmatmul.mubr.bf16.gmra.mxu0 %v560
        %v771 = vpop.f32.mrf.mxu0
        %v772 = vadd.f32 %v597, %v771
        %v773 = vpop.f32.mrf.mxu0
        %v774 = vadd.f32 %v601, %v773
        %v775 = vpop.f32.mrf.mxu0
        %v776 = vpop.f32.mrf.mxu0
        %777 = vdwg.mxu0
        %778 = vmatprep.subr.bf16.mxu0 0
        %779 = vmatpush1.bf16.msra.mxu0 %v712
        %780 = vmatprep.subr.bf16.mxu0 0
        %781 = vmatpush1.bf16.msra.mxu0 %v709
        %782 = vmatprep.subr.bf16.mxu0 0
        %783 = vmatpush1.bf16.msra.mxu0 %v706
        %784 = vmatprep.subr.bf16.mxu0 0
        %785 = vmatpush1.bf16.msra.mxu0 %v703
        %786 = vmatprep.subr.bf16.mxu0 0
        %787 = vmatpush1.bf16.msra.mxu0 %v700
        %788 = vmatprep.subr.bf16.mxu0 0
        %789 = vmatpush1.bf16.msra.mxu0 %v697
        %790 = vmatprep.subr.bf16.mxu0 0
        %791 = vmatpush1.bf16.msra.mxu0 %v694
        %792 = vmatprep.subr.bf16.mxu0 0
        %793 = vmatpush1.bf16.msra.mxu0 %v691
        %794 = vmatprep.subr.bf16.mxu0 0
        %795 = vmatpush2.bf16.msra.mxu0 0
        %796 = vmatprep.subr.bf16.mxu0 0
        %797 = vmatpush2.bf16.msra.mxu0 0
        %798 = vmatprep.subr.bf16.mxu0 0
        %799 = vmatpush2.bf16.msra.mxu0 0
        %800 = vmatprep.subr.bf16.mxu0 0
        %801 = vmatpush2.bf16.msra.mxu0 0
        %802 = vmatprep.subr.bf16.mxu0 0
        %803 = vmatpush2.bf16.msra.mxu0 0
        %804 = vmatprep.subr.bf16.mxu0 0
        %805 = vmatpush2.bf16.msra.mxu0 0
        %806 = vmatprep.subr.bf16.mxu0 0
        %807 = vmatpush2.bf16.msra.mxu0 0
        %808 = vmatprep.subr.bf16.mxu0 0
        %809 = vmatpush2.bf16.msra.mxu0 0
        %810 = vmatprep.mubr.bf16.mxu0 0
        %811 = vmatmul.mubr.bf16.gmra.mxu0 %v560
        %v812 = vpop.f32.mrf.mxu0
        %v813 = vadd.f32 %v605, %v812
        %v814 = vpop.f32.mrf.mxu0
        %v815 = vpop.f32.mrf.mxu0
        %v816 = vpop.f32.mrf.mxu0
        %817 = vdwg.mxu0
        %v818 = vpack.c.bf16 %v772, %v772
        %v819 = vpack.c.bf16 %v774, %v774
        %v820 = vpack.c.bf16 %v813, %v813
        %vm821 = vcmask 261120
        %v823 = vsel %vm821, %v818, 0
        %v826 = vsel %vm821, %v819, 0
        %828 = vmatprep.subr.bf16.mxu0 0
        %829 = vmatpush1.bf16.xpose.msra.mxu0 0
        %830 = vmatprep.subr.bf16.mxu0 0
        %831 = vmatpush1.bf16.xpose.msra.mxu0 0
        %832 = vmatprep.subr.bf16.mxu0 0
        %833 = vmatpush1.bf16.xpose.msra.mxu0 0
        %834 = vmatprep.subr.bf16.mxu0 0
        %835 = vmatpush1.bf16.xpose.msra.mxu0 0
        %836 = vmatprep.subr.bf16.mxu0 0
        %837 = vmatpush1.bf16.xpose.msra.mxu0 0
        %838 = vmatprep.subr.bf16.mxu0 0
        %839 = vmatpush1.bf16.xpose.msra.mxu0 0
        %840 = vmatprep.subr.bf16.mxu0 0
        %841 = vmatpush1.bf16.xpose.msra.mxu0 0
        %842 = vmatprep.subr.bf16.mxu0 0
        %843 = vmatpush1.bf16.xpose.msra.mxu0 %v826
        %844 = vmatprep.subr.bf16.mxu0 0
        %845 = vmatpush2.bf16.xpose.msra.mxu0 0
        %846 = vmatprep.subr.bf16.mxu0 0
        %847 = vmatpush2.bf16.xpose.msra.mxu0 0
        %848 = vmatprep.subr.bf16.mxu0 0
        %849 = vmatpush2.bf16.xpose.msra.mxu0 0
        %850 = vmatprep.subr.bf16.mxu0 0
        %851 = vmatpush2.bf16.xpose.msra.mxu0 0
        %852 = vmatprep.subr.bf16.mxu0 0
        %853 = vmatpush2.bf16.xpose.msra.mxu0 0
        %854 = vmatprep.subr.bf16.mxu0 0
        %855 = vmatpush2.bf16.xpose.msra.mxu0 0
        %856 = vmatprep.subr.bf16.mxu0 0
        %857 = vmatpush2.bf16.xpose.msra.mxu0 0
        %858 = vmatprep.subr.bf16.mxu0 0
        %859 = vmatpush2.bf16.xpose.msra.mxu0 0
        %860 = vmatprep.mubr.bf16.mxu0 0
        %861 = vmatmul.mubr.bf16.gmra.mxu0 %v823
        %v862 = vpop.f32.mrf.mxu0
        %v863 = vadd.f32 %v535, %v862
        %v864 = vpop.f32.mrf.mxu0
        %v865 = vpop.f32.mrf.mxu0
        %v866 = vpop.f32.mrf.mxu0
        %867 = vdwg.mxu0
        %vm868 = vcmask 64512
        %v869 = vsel %vm868, %v863, -inf
        %870 = vmax.xlane.f32.xlu0 %v869
        %v871 = vpop.xlane.xlu0 %870
        %v872 = vsub.f32 %v863, %v871
        %v873 = vmul.f32 %v872, 1.442695
        %v874 = vpow.pop %v873
        %v875 = vsel %vm868, %v874, 0.0
        %876 = vadd.xlane.f32.xlu0 %v875
        %v877 = vpop.xlane.xlu0 %876
        %v878 = vrcp.pop %v877
        %v879 = vmul.f32 %v874, %v878
        %v880 = vpack.c.bf16 %v879, %v879
        %v882 = vsel %vm868, %v880, 0
        %vm884 = vcmask 1043456
        %v886 = vsel %vm884, %v820, 0
        %888 = vmatprep.subr.bf16.mxu0 0
        %889 = vmatpush1.bf16.msra.mxu0 0
        %890 = vmatprep.subr.bf16.mxu0 0
        %891 = vmatpush1.bf16.msra.mxu0 0
        %892 = vmatprep.subr.bf16.mxu0 0
        %893 = vmatpush1.bf16.msra.mxu0 0
        %894 = vmatprep.subr.bf16.mxu0 0
        %895 = vmatpush1.bf16.msra.mxu0 0
        %896 = vmatprep.subr.bf16.mxu0 0
        %897 = vmatpush1.bf16.msra.mxu0 0
        %898 = vmatprep.subr.bf16.mxu0 0
        %899 = vmatpush1.bf16.msra.mxu0 0
        %900 = vmatprep.subr.bf16.mxu0 0
        %901 = vmatpush1.bf16.msra.mxu0 0
        %902 = vmatprep.subr.bf16.mxu0 0
        %903 = vmatpush1.bf16.msra.mxu0 %v886
        %904 = vmatprep.subr.bf16.mxu0 0
        %905 = vmatpush2.bf16.msra.mxu0 0
        %906 = vmatprep.subr.bf16.mxu0 0
        %907 = vmatpush2.bf16.msra.mxu0 0
        %908 = vmatprep.subr.bf16.mxu0 0
        %909 = vmatpush2.bf16.msra.mxu0 0
        %910 = vmatprep.subr.bf16.mxu0 0
        %911 = vmatpush2.bf16.msra.mxu0 0
        %912 = vmatprep.subr.bf16.mxu0 0
        %913 = vmatpush2.bf16.msra.mxu0 0
        %914 = vmatprep.subr.bf16.mxu0 0
        %915 = vmatpush2.bf16.msra.mxu0 0
        %916 = vmatprep.subr.bf16.mxu0 0
        %917 = vmatpush2.bf16.msra.mxu0 0
        %918 = vmatprep.subr.bf16.mxu0 0
        %919 = vmatpush2.bf16.msra.mxu0 0
        %920 = vmatprep.mubr.bf16.mxu0 0
        %921 = vmatmul.mubr.bf16.gmra.mxu0 %v882
        %v922 = vpop.f32.mrf.mxu0
        %v923 = vadd.f32 0.0, %v922
        %v924 = vpop.f32.mrf.mxu0
        %v925 = vpop.f32.mrf.mxu0
        %v926 = vpop.f32.mrf.mxu0
        %927 = vdwg.mxu0
        %928 = vst.msk [vmem:[#allocation3] sm:$0xff] %vm821, %v923
        %930 = vrot.lane.b32.xlu0 %v818, 96
        %v931 = vpop.permute.xlu0 %930
        %933 = vrot.lane.b32.xlu0 %v819, 96
        %v934 = vpop.permute.xlu0 %933
        %v936 = vsel %vm821, %v931, 0
        %v939 = vsel %vm821, %v934, 0
        %941 = vmatprep.subr.bf16.mxu0 0
        %942 = vmatpush1.bf16.xpose.msra.mxu0 0
        %943 = vmatprep.subr.bf16.mxu0 0
        %944 = vmatpush1.bf16.xpose.msra.mxu0 0
        %945 = vmatprep.subr.bf16.mxu0 0
        %946 = vmatpush1.bf16.xpose.msra.mxu0 0
        %947 = vmatprep.subr.bf16.mxu0 0
        %948 = vmatpush1.bf16.xpose.msra.mxu0 0
        %949 = vmatprep.subr.bf16.mxu0 0
        %950 = vmatpush1.bf16.xpose.msra.mxu0 0
        %951 = vmatprep.subr.bf16.mxu0 0
        %952 = vmatpush1.bf16.xpose.msra.mxu0 0
        %953 = vmatprep.subr.bf16.mxu0 0
        %954 = vmatpush1.bf16.xpose.msra.mxu0 0
        %955 = vmatprep.subr.bf16.mxu0 0
        %956 = vmatpush1.bf16.xpose.msra.mxu0 %v939
        %957 = vmatprep.subr.bf16.mxu0 0
        %958 = vmatpush2.bf16.xpose.msra.mxu0 0
        %959 = vmatprep.subr.bf16.mxu0 0
        %960 = vmatpush2.bf16.xpose.msra.mxu0 0
        %961 = vmatprep.subr.bf16.mxu0 0
        %962 = vmatpush2.bf16.xpose.msra.mxu0 0
        %963 = vmatprep.subr.bf16.mxu0 0
        %964 = vmatpush2.bf16.xpose.msra.mxu0 0
        %965 = vmatprep.subr.bf16.mxu0 0
        %966 = vmatpush2.bf16.xpose.msra.mxu0 0
        %967 = vmatprep.subr.bf16.mxu0 0
        %968 = vmatpush2.bf16.xpose.msra.mxu0 0
        %969 = vmatprep.subr.bf16.mxu0 0
        %970 = vmatpush2.bf16.xpose.msra.mxu0 0
        %971 = vmatprep.subr.bf16.mxu0 0
        %972 = vmatpush2.bf16.xpose.msra.mxu0 0
        %973 = vmatprep.mubr.bf16.mxu0 0
        %974 = vmatmul.mubr.bf16.gmra.mxu0 %v936
        %v975 = vpop.f32.mrf.mxu0
        %v976 = vadd.f32 %v535, %v975
        %v977 = vpop.f32.mrf.mxu0
        %v978 = vpop.f32.mrf.mxu0
        %v979 = vpop.f32.mrf.mxu0
        %980 = vdwg.mxu0
        %v981 = vsel %vm868, %v976, -inf
        %982 = vmax.xlane.f32.xlu0 %v981
        %v983 = vpop.xlane.xlu0 %982
        %v984 = vsub.f32 %v976, %v983
        %v985 = vmul.f32 %v984, 1.442695
        %v986 = vpow.pop %v985
        %v987 = vsel %vm868, %v986, 0.0
        %988 = vadd.xlane.f32.xlu0 %v987
        %v989 = vpop.xlane.xlu0 %988
        %v990 = vrcp.pop %v989
        %v991 = vmul.f32 %v986, %v990
        %v992 = vpack.c.bf16 %v991, %v991
        %994 = vrot.lane.b32.xlu0 %v820, 96
        %v995 = vpop.permute.xlu0 %994
        %v997 = vsel %vm868, %v992, 0
        %v1000 = vsel %vm884, %v995, 0
        %1002 = vmatprep.subr.bf16.mxu0 0
        %1003 = vmatpush1.bf16.msra.mxu0 0
        %1004 = vmatprep.subr.bf16.mxu0 0
        %1005 = vmatpush1.bf16.msra.mxu0 0
        %1006 = vmatprep.subr.bf16.mxu0 0
        %1007 = vmatpush1.bf16.msra.mxu0 0
        %1008 = vmatprep.subr.bf16.mxu0 0
        %1009 = vmatpush1.bf16.msra.mxu0 0
        %1010 = vmatprep.subr.bf16.mxu0 0
        %1011 = vmatpush1.bf16.msra.mxu0 0
        %1012 = vmatprep.subr.bf16.mxu0 0
        %1013 = vmatpush1.bf16.msra.mxu0 0
        %1014 = vmatprep.subr.bf16.mxu0 0
        %1015 = vmatpush1.bf16.msra.mxu0 0
        %1016 = vmatprep.subr.bf16.mxu0 0
        %1017 = vmatpush1.bf16.msra.mxu0 %v1000
        %1018 = vmatprep.subr.bf16.mxu0 0
        %1019 = vmatpush2.bf16.msra.mxu0 0
        %1020 = vmatprep.subr.bf16.mxu0 0
        %1021 = vmatpush2.bf16.msra.mxu0 0
        %1022 = vmatprep.subr.bf16.mxu0 0
        %1023 = vmatpush2.bf16.msra.mxu0 0
        %1024 = vmatprep.subr.bf16.mxu0 0
        %1025 = vmatpush2.bf16.msra.mxu0 0
        %1026 = vmatprep.subr.bf16.mxu0 0
        %1027 = vmatpush2.bf16.msra.mxu0 0
        %1028 = vmatprep.subr.bf16.mxu0 0
        %1029 = vmatpush2.bf16.msra.mxu0 0
        %1030 = vmatprep.subr.bf16.mxu0 0
        %1031 = vmatpush2.bf16.msra.mxu0 0
        %1032 = vmatprep.subr.bf16.mxu0 0
        %1033 = vmatpush2.bf16.msra.mxu0 0
        %1034 = vmatprep.mubr.bf16.mxu0 0
        %1035 = vmatmul.mubr.bf16.gmra.mxu0 %v997
        %v1036 = vpop.f32.mrf.mxu0
        %v1037 = vadd.f32 0.0, %v1036
        %v1038 = vpop.f32.mrf.mxu0
        %v1039 = vpop.f32.mrf.mxu0
        %v1040 = vpop.f32.mrf.mxu0
        %1041 = vdwg.mxu0
        %1043 = vrot.lane.b32.xlu0 %v1037, 32
        %v1044 = vpop.permute.xlu0 %1043
        %vm1046 = vcmask 523520
        %1047 = vst.msk [vmem:[#allocation3] sm:$0xff] %vm1046, %v1044
        %1048 = vrot.lane.b32.xlu0 %v818, 64
        %v1049 = vpop.permute.xlu0 %1048
        %1050 = vrot.lane.b32.xlu0 %v819, 64
        %v1051 = vpop.permute.xlu0 %1050
        %v1053 = vsel %vm821, %v1049, 0
        %v1056 = vsel %vm821, %v1051, 0
        %1058 = vmatprep.subr.bf16.mxu0 0
        %1059 = vmatpush1.bf16.xpose.msra.mxu0 0
        %1060 = vmatprep.subr.bf16.mxu0 0
        %1061 = vmatpush1.bf16.xpose.msra.mxu0 0
        %1062 = vmatprep.subr.bf16.mxu0 0
        %1063 = vmatpush1.bf16.xpose.msra.mxu0 0
        %1064 = vmatprep.subr.bf16.mxu0 0
        %1065 = vmatpush1.bf16.xpose.msra.mxu0 0
        %1066 = vmatprep.subr.bf16.mxu0 0
        %1067 = vmatpush1.bf16.xpose.msra.mxu0 0
        %1068 = vmatprep.subr.bf16.mxu0 0
        %1069 = vmatpush1.bf16.xpose.msra.mxu0 0
        %1070 = vmatprep.subr.bf16.mxu0 0
        %1071 = vmatpush1.bf16.xpose.msra.mxu0 0
        %1072 = vmatprep.subr.bf16.mxu0 0
        %1073 = vmatpush1.bf16.xpose.msra.mxu0 %v1056
        %1074 = vmatprep.subr.bf16.mxu0 0
        %1075 = vmatpush2.bf16.xpose.msra.mxu0 0
        %1076 = vmatprep.subr.bf16.mxu0 0
        %1077 = vmatpush2.bf16.xpose.msra.mxu0 0
        %1078 = vmatprep.subr.bf16.mxu0 0
        %1079 = vmatpush2.bf16.xpose.msra.mxu0 0
        %1080 = vmatprep.subr.bf16.mxu0 0
        %1081 = vmatpush2.bf16.xpose.msra.mxu0 0
        %1082 = vmatprep.subr.bf16.mxu0 0
        %1083 = vmatpush2.bf16.xpose.msra.mxu0 0
        %1084 = vmatprep.subr.bf16.mxu0 0
        %1085 = vmatpush2.bf16.xpose.msra.mxu0 0
        %1086 = vmatprep.subr.bf16.mxu0 0
        %1087 = vmatpush2.bf16.xpose.msra.mxu0 0
        %1088 = vmatprep.subr.bf16.mxu0 0
        %1089 = vmatpush2.bf16.xpose.msra.mxu0 0
        %1090 = vmatprep.mubr.bf16.mxu0 0
        %1091 = vmatmul.mubr.bf16.gmra.mxu0 %v1053
        %v1092 = vpop.f32.mrf.mxu0
        %v1093 = vadd.f32 %v535, %v1092
        %v1094 = vpop.f32.mrf.mxu0
        %v1095 = vpop.f32.mrf.mxu0
        %v1096 = vpop.f32.mrf.mxu0
        %1097 = vdwg.mxu0
        %v1098 = vsel %vm868, %v1093, -inf
        %1099 = vmax.xlane.f32.xlu0 %v1098
        %v1100 = vpop.xlane.xlu0 %1099
        %v1101 = vsub.f32 %v1093, %v1100
        %v1102 = vmul.f32 %v1101, 1.442695
        %v1103 = vpow.pop %v1102
        %v1104 = vsel %vm868, %v1103, 0.0
        %1105 = vadd.xlane.f32.xlu0 %v1104
        %v1106 = vpop.xlane.xlu0 %1105
        %v1107 = vrcp.pop %v1106
        %v1108 = vmul.f32 %v1103, %v1107
        %v1109 = vpack.c.bf16 %v1108, %v1108
        %1110 = vrot.lane.b32.xlu0 %v820, 64
        %v1111 = vpop.permute.xlu0 %1110
        %v1113 = vsel %vm868, %v1109, 0
        %v1116 = vsel %vm884, %v1111, 0
        %1118 = vmatprep.subr.bf16.mxu0 0
        %1119 = vmatpush1.bf16.msra.mxu0 0
        %1120 = vmatprep.subr.bf16.mxu0 0
        %1121 = vmatpush1.bf16.msra.mxu0 0
        %1122 = vmatprep.subr.bf16.mxu0 0
        %1123 = vmatpush1.bf16.msra.mxu0 0
        %1124 = vmatprep.subr.bf16.mxu0 0
        %1125 = vmatpush1.bf16.msra.mxu0 0
        %1126 = vmatprep.subr.bf16.mxu0 0
        %1127 = vmatpush1.bf16.msra.mxu0 0
        %1128 = vmatprep.subr.bf16.mxu0 0
        %1129 = vmatpush1.bf16.msra.mxu0 0
        %1130 = vmatprep.subr.bf16.mxu0 0
        %1131 = vmatpush1.bf16.msra.mxu0 0
        %1132 = vmatprep.subr.bf16.mxu0 0
        %1133 = vmatpush1.bf16.msra.mxu0 %v1116
        %1134 = vmatprep.subr.bf16.mxu0 0
        %1135 = vmatpush2.bf16.msra.mxu0 0
        %1136 = vmatprep.subr.bf16.mxu0 0
        %1137 = vmatpush2.bf16.msra.mxu0 0
        %1138 = vmatprep.subr.bf16.mxu0 0
        %1139 = vmatpush2.bf16.msra.mxu0 0
        %1140 = vmatprep.subr.bf16.mxu0 0
        %1141 = vmatpush2.bf16.msra.mxu0 0
        %1142 = vmatprep.subr.bf16.mxu0 0
        %1143 = vmatpush2.bf16.msra.mxu0 0
        %1144 = vmatprep.subr.bf16.mxu0 0
        %1145 = vmatpush2.bf16.msra.mxu0 0
        %1146 = vmatprep.subr.bf16.mxu0 0
        %1147 = vmatpush2.bf16.msra.mxu0 0
        %1148 = vmatprep.subr.bf16.mxu0 0
        %1149 = vmatpush2.bf16.msra.mxu0 0
        %1150 = vmatprep.mubr.bf16.mxu0 0
        %1151 = vmatmul.mubr.bf16.gmra.mxu0 %v1113
        %v1152 = vpop.f32.mrf.mxu0
        %v1153 = vadd.f32 0.0, %v1152
        %v1154 = vpop.f32.mrf.mxu0
        %v1155 = vpop.f32.mrf.mxu0
        %v1156 = vpop.f32.mrf.mxu0
        %1157 = vdwg.mxu0
        %1159 = vrot.lane.b32.xlu0 %v1153, 64
        %v1160 = vpop.permute.xlu0 %1159
        %vm1162 = vcmask 785920
        %1163 = vst.msk [vmem:[#allocation3] sm:$0xff] %vm1162, %v1160
        %1164 = vrot.lane.b32.xlu0 %v818, 32
        %v1165 = vpop.permute.xlu0 %1164
        %1166 = vrot.lane.b32.xlu0 %v819, 32
        %v1167 = vpop.permute.xlu0 %1166
        %v1169 = vsel %vm821, %v1165, 0
        %v1172 = vsel %vm821, %v1167, 0
        %1174 = vmatprep.subr.bf16.mxu0 0
        %1175 = vmatpush1.bf16.xpose.msra.mxu0 0
        %1176 = vmatprep.subr.bf16.mxu0 0
        %1177 = vmatpush1.bf16.xpose.msra.mxu0 0
        %1178 = vmatprep.subr.bf16.mxu0 0
        %1179 = vmatpush1.bf16.xpose.msra.mxu0 0
        %1180 = vmatprep.subr.bf16.mxu0 0
        %1181 = vmatpush1.bf16.xpose.msra.mxu0 0
        %1182 = vmatprep.subr.bf16.mxu0 0
        %1183 = vmatpush1.bf16.xpose.msra.mxu0 0
        %1184 = vmatprep.subr.bf16.mxu0 0
        %1185 = vmatpush1.bf16.xpose.msra.mxu0 0
        %1186 = vmatprep.subr.bf16.mxu0 0
        %1187 = vmatpush1.bf16.xpose.msra.mxu0 0
        %1188 = vmatprep.subr.bf16.mxu0 0
        %1189 = vmatpush1.bf16.xpose.msra.mxu0 %v1172
        %1190 = vmatprep.subr.bf16.mxu0 0
        %1191 = vmatpush2.bf16.xpose.msra.mxu0 0
        %1192 = vmatprep.subr.bf16.mxu0 0
        %1193 = vmatpush2.bf16.xpose.msra.mxu0 0
        %1194 = vmatprep.subr.bf16.mxu0 0
        %1195 = vmatpush2.bf16.xpose.msra.mxu0 0
        %1196 = vmatprep.subr.bf16.mxu0 0
        %1197 = vmatpush2.bf16.xpose.msra.mxu0 0
        %1198 = vmatprep.subr.bf16.mxu0 0
        %1199 = vmatpush2.bf16.xpose.msra.mxu0 0
        %1200 = vmatprep.subr.bf16.mxu0 0
        %1201 = vmatpush2.bf16.xpose.msra.mxu0 0
        %1202 = vmatprep.subr.bf16.mxu0 0
        %1203 = vmatpush2.bf16.xpose.msra.mxu0 0
        %1204 = vmatprep.subr.bf16.mxu0 0
        %1205 = vmatpush2.bf16.xpose.msra.mxu0 0
        %1206 = vmatprep.mubr.bf16.mxu0 0
        %1207 = vmatmul.mubr.bf16.gmra.mxu0 %v1169
        %v1208 = vpop.f32.mrf.mxu0
        %v1209 = vadd.f32 %v535, %v1208
        %v1210 = vpop.f32.mrf.mxu0
        %v1211 = vpop.f32.mrf.mxu0
        %v1212 = vpop.f32.mrf.mxu0
        %1213 = vdwg.mxu0
        %v1214 = vsel %vm868, %v1209, -inf
        %1215 = vmax.xlane.f32.xlu0 %v1214
        %v1216 = vpop.xlane.xlu0 %1215
        %v1217 = vsub.f32 %v1209, %v1216
        %v1218 = vmul.f32 %v1217, 1.442695
        %v1219 = vpow.pop %v1218
        %v1220 = vsel %vm868, %v1219, 0.0
        %1221 = vadd.xlane.f32.xlu0 %v1220
        %v1222 = vpop.xlane.xlu0 %1221
        %v1223 = vrcp.pop %v1222
        %v1224 = vmul.f32 %v1219, %v1223
        %v1225 = vpack.c.bf16 %v1224, %v1224
        %1226 = vrot.lane.b32.xlu0 %v820, 32
        %v1227 = vpop.permute.xlu0 %1226
        %v1229 = vsel %vm868, %v1225, 0
        %v1232 = vsel %vm884, %v1227, 0
        %1234 = vmatprep.subr.bf16.mxu0 0
        %1235 = vmatpush1.bf16.msra.mxu0 0
        %1236 = vmatprep.subr.bf16.mxu0 0
        %1237 = vmatpush1.bf16.msra.mxu0 0
        %1238 = vmatprep.subr.bf16.mxu0 0
        %1239 = vmatpush1.bf16.msra.mxu0 0
        %1240 = vmatprep.subr.bf16.mxu0 0
        %1241 = vmatpush1.bf16.msra.mxu0 0
        %1242 = vmatprep.subr.bf16.mxu0 0
        %1243 = vmatpush1.bf16.msra.mxu0 0
        %1244 = vmatprep.subr.bf16.mxu0 0
        %1245 = vmatpush1.bf16.msra.mxu0 0
        %1246 = vmatprep.subr.bf16.mxu0 0
        %1247 = vmatpush1.bf16.msra.mxu0 0
        %1248 = vmatprep.subr.bf16.mxu0 0
        %1249 = vmatpush1.bf16.msra.mxu0 %v1232
        %1250 = vmatprep.subr.bf16.mxu0 0
        %1251 = vmatpush2.bf16.msra.mxu0 0
        %1252 = vmatprep.subr.bf16.mxu0 0
        %1253 = vmatpush2.bf16.msra.mxu0 0
        %1254 = vmatprep.subr.bf16.mxu0 0
        %1255 = vmatpush2.bf16.msra.mxu0 0
        %1256 = vmatprep.subr.bf16.mxu0 0
        %1257 = vmatpush2.bf16.msra.mxu0 0
        %1258 = vmatprep.subr.bf16.mxu0 0
        %1259 = vmatpush2.bf16.msra.mxu0 0
        %1260 = vmatprep.subr.bf16.mxu0 0
        %1261 = vmatpush2.bf16.msra.mxu0 0
        %1262 = vmatprep.subr.bf16.mxu0 0
        %1263 = vmatpush2.bf16.msra.mxu0 0
        %1264 = vmatprep.subr.bf16.mxu0 0
        %1265 = vmatpush2.bf16.msra.mxu0 0
        %1266 = vmatprep.mubr.bf16.mxu0 0
        %1267 = vmatmul.mubr.bf16.gmra.mxu0 %v1229
        %v1268 = vpop.f32.mrf.mxu0
        %v1269 = vadd.f32 0.0, %v1268
        %v1270 = vpop.f32.mrf.mxu0
        %v1271 = vpop.f32.mrf.mxu0
        %v1272 = vpop.f32.mrf.mxu0
        %1273 = vdwg.mxu0
        %1275 = vrot.lane.b32.xlu0 %v1269, 96
        %v1276 = vpop.permute.xlu0 %1275
        %vm1278 = vcmask 1048320
        %1279 = vst.msk [vmem:[#allocation3] sm:$0xff] %vm1278, %v1276
        %v1280 = vld [vmem:[#allocation3] sm:$0xff]
        %v1281 = vpack.c.bf16 %v1280, %v1280
        %v1282 = vld [vmem:[%s526] sm:$0xf]
        %v1283 = vld [vmem:[%s526 + $0x4] sm:$0xf]
        %v1284 = vld [vmem:[%s526 + $0x8] sm:$0xf]
        %v1285 = vld [vmem:[%s526 + $0xc] sm:$0xf]
        %v1286 = vld [vmem:[%s526 + $0x10] sm:$0xf]
        %v1287 = vld [vmem:[%s526 + $0x14] sm:$0xf]
        %v1288 = vld [vmem:[%s526 + $0x18] sm:$0xf]
        %v1289 = vld [vmem:[%s526 + $0x1c] sm:$0xf]
        %v1290 = vld [vmem:[%s526 + $0x20] sm:$0xf]
        %v1291 = vld [vmem:[%s526 + $0x24] sm:$0xf]
        %v1292 = vld [vmem:[%s526 + $0x28] sm:$0xf]
        %v1293 = vld [vmem:[%s526 + $0x2c] sm:$0xf]
        %v1294 = vld [vmem:[%s526 + $0x30] sm:$0xf]
        %v1295 = vld [vmem:[%s526 + $0x34] sm:$0xf]
        %v1296 = vld [vmem:[%s526 + $0x38] sm:$0xf]
        %v1297 = vld [vmem:[%s526 + $0x3c] sm:$0xf]
        %v1314 = vunpack.c.l.b16 %v1282
        %v1315 = vunpack.c.l.b16 %v1283
        %v1316 = vunpack.c.l.b16 %v1284
        %v1317 = vunpack.c.l.b16 %v1285
        %v1318 = vunpack.c.l.b16 %v1286
        %v1319 = vunpack.c.l.b16 %v1287
        %v1320 = vunpack.c.l.b16 %v1288
        %v1321 = vunpack.c.l.b16 %v1289
        %v1322 = vunpack.c.l.b16 %v1290
        %v1323 = vunpack.c.l.b16 %v1291
        %v1324 = vunpack.c.l.b16 %v1292
        %v1325 = vunpack.c.l.b16 %v1293
        %v1326 = vunpack.c.l.b16 %v1294
        %v1327 = vunpack.c.l.b16 %v1295
        %v1328 = vunpack.c.l.b16 %v1296
        %v1329 = vunpack.c.l.b16 %v1297
        %v1330 = vpack.c.b16 %v1315, %v1314
        %v1331 = vpack.c.b16 %v1317, %v1316
        %v1332 = vpack.c.b16 %v1319, %v1318
        %v1333 = vpack.c.b16 %v1321, %v1320
        %v1334 = vpack.c.b16 %v1323, %v1322
        %v1335 = vpack.c.b16 %v1325, %v1324
        %v1336 = vpack.c.b16 %v1327, %v1326
        %v1337 = vpack.c.b16 %v1329, %v1328
        %1346 = vmatprep.subr.bf16.mxu0 0
        %1347 = vmatpush1.bf16.msra.mxu0 %v1337
        %1348 = vmatprep.subr.bf16.mxu0 0
        %1349 = vmatpush1.bf16.msra.mxu0 %v1336
        %1350 = vmatprep.subr.bf16.mxu0 0
        %1351 = vmatpush1.bf16.msra.mxu0 %v1335
        %1352 = vmatprep.subr.bf16.mxu0 0
        %1353 = vmatpush1.bf16.msra.mxu0 %v1334
        %1354 = vmatprep.subr.bf16.mxu0 0
        %1355 = vmatpush1.bf16.msra.mxu0 %v1333
        %1356 = vmatprep.subr.bf16.mxu0 0
        %1357 = vmatpush1.bf16.msra.mxu0 %v1332
        %1358 = vmatprep.subr.bf16.mxu0 0
        %1359 = vmatpush1.bf16.msra.mxu0 %v1331
        %1360 = vmatprep.subr.bf16.mxu0 0
        %1361 = vmatpush1.bf16.msra.mxu0 %v1330
        %1362 = vmatprep.subr.bf16.mxu0 0
        %1363 = vmatpush2.bf16.msra.mxu0 0
        %1364 = vmatprep.subr.bf16.mxu0 0
        %1365 = vmatpush2.bf16.msra.mxu0 0
        %1366 = vmatprep.subr.bf16.mxu0 0
        %1367 = vmatpush2.bf16.msra.mxu0 0
        %1368 = vmatprep.subr.bf16.mxu0 0
        %1369 = vmatpush2.bf16.msra.mxu0 0
        %1370 = vmatprep.subr.bf16.mxu0 0
        %1371 = vmatpush2.bf16.msra.mxu0 0
        %1372 = vmatprep.subr.bf16.mxu0 0
        %1373 = vmatpush2.bf16.msra.mxu0 0
        %1374 = vmatprep.subr.bf16.mxu0 0
        %1375 = vmatpush2.bf16.msra.mxu0 0
        %1376 = vmatprep.subr.bf16.mxu0 0
        %1377 = vmatpush2.bf16.msra.mxu0 0
        %1378 = vmatprep.mubr.bf16.mxu0 0
        %1379 = vmatmul.mubr.bf16.gmra.mxu0 %v1281
        %v1380 = vpop.f32.mrf.mxu0
        %v1381 = vadd.f32 %v542, %v1380
        %v1382 = vpop.f32.mrf.mxu0
        %v1383 = vpop.f32.mrf.mxu0
        %v1384 = vpop.f32.mrf.mxu0
        %1385 = vdwg.mxu0
        %v1386 = vadd.f32 %v534, %v1381
        %1387 = vadd.xlane.f32.xlu0 %v1386
        %v1388 = vpop.xlane.xlu0 %1387
        %v1389 = vmul.f32 %v1388, %v548
        %v1390 = vsub.f32 %v1386, %v1389
        %v1391 = vmul.f32 %v1390, %v1390
        %1392 = vadd.xlane.f32.xlu0 %v1391
        %v1393 = vpop.xlane.xlu0 %1392
        %v1394 = vmul.f32 %v1393, %v548
        %v1395 = vadd.f32 %v1394, 1e-05
        %v1396 = vrsqrt.pop %v1395
        %v1397 = vmul.f32 %v1390, %v1396
        %v1398 = vmul.f32 %v1397, %v538
        %v1399 = vadd.f32 %v1398, %v539
        %v1400 = vpack.c.bf16 %v1399, %v1399
        %v1401 = vld [vmem:[%s433] sm:$0xff]
        %v1402 = vld [vmem:[%s433 + $0x8] sm:$0xff]
        %v1403 = vld [vmem:[%s433 + $0x10] sm:$0xff]
        %v1404 = vld [vmem:[%s433 + $0x18] sm:$0xff]
        %v1405 = vld [vmem:[%s433 + $0x20] sm:$0xff]
        %v1406 = vld [vmem:[%s433 + $0x28] sm:$0xff]
        %v1407 = vld [vmem:[%s433 + $0x30] sm:$0xff]
        %v1408 = vld [vmem:[%s433 + $0x38] sm:$0xff]
        %v1409 = vld [vmem:[%s433 + $0x40] sm:$0xff]
        %v1410 = vld [vmem:[%s433 + $0x48] sm:$0xff]
        %v1411 = vld [vmem:[%s433 + $0x50] sm:$0xff]
        %v1412 = vld [vmem:[%s433 + $0x58] sm:$0xff]
        %v1413 = vld [vmem:[%s433 + $0x60] sm:$0xff]
        %v1414 = vld [vmem:[%s433 + $0x68] sm:$0xff]
        %v1415 = vld [vmem:[%s433 + $0x70] sm:$0xff]
        %v1416 = vld [vmem:[%s433 + $0x78] sm:$0xff]
        %v1417 = vld [vmem:[%s433 + $0x80] sm:$0xff]
        %v1418 = vld [vmem:[%s433 + $0x88] sm:$0xff]
        %v1419 = vld [vmem:[%s433 + $0x90] sm:$0xff]
        %v1420 = vld [vmem:[%s433 + $0x98] sm:$0xff]
        %v1421 = vld [vmem:[%s433 + $0xa0] sm:$0xff]
        %v1422 = vld [vmem:[%s433 + $0xa8] sm:$0xff]
        %v1423 = vld [vmem:[%s433 + $0xb0] sm:$0xff]
        %v1424 = vld [vmem:[%s433 + $0xb8] sm:$0xff]
        %v1425 = vld [vmem:[%s433 + $0xc0] sm:$0xff]
        %v1426 = vld [vmem:[%s433 + $0xc8] sm:$0xff]
        %v1427 = vld [vmem:[%s433 + $0xd0] sm:$0xff]
        %v1428 = vld [vmem:[%s433 + $0xd8] sm:$0xff]
        %v1429 = vld [vmem:[%s433 + $0xe0] sm:$0xff]
        %v1430 = vld [vmem:[%s433 + $0xe8] sm:$0xff]
        %v1431 = vld [vmem:[%s433 + $0xf0] sm:$0xff]
        %v1432 = vld [vmem:[%s433 + $0xf8] sm:$0xff]
        %v1434 = vlaneseq
        %v1435 = vshrl.u32 %v1434, 7
        %v1436 = vsub.s32 0, %v1435
        %v1437 = vrot.slane %v544, %v1436
        %v1438 = vlaneseq
        %v1439 = vshrl.u32 %v1438, 7
        %v1440 = vsub.s32 1, %v1439
        %v1441 = vrot.slane %v544, %v1440
        %v1442 = vlaneseq
        %v1443 = vshrl.u32 %v1442, 7
        %v1444 = vsub.s32 2, %v1443
        %v1445 = vrot.slane %v544, %v1444
        %v1446 = vlaneseq
        %v1447 = vshrl.u32 %v1446, 7
        %v1448 = vsub.s32 3, %v1447
        %v1449 = vrot.slane %v544, %v1448
        %v1486 = vunpack.c.l.b16 %v1401
        %v1487 = vunpack.c.h.b16 %v1401
        %v1488 = vunpack.c.l.b16 %v1402
        %v1489 = vunpack.c.h.b16 %v1402
        %v1490 = vunpack.c.l.b16 %v1403
        %v1491 = vunpack.c.h.b16 %v1403
        %v1492 = vunpack.c.l.b16 %v1404
        %v1493 = vunpack.c.h.b16 %v1404
        %v1494 = vunpack.c.l.b16 %v1405
        %v1495 = vunpack.c.h.b16 %v1405
        %v1496 = vunpack.c.l.b16 %v1406
        %v1497 = vunpack.c.h.b16 %v1406
        %v1498 = vunpack.c.l.b16 %v1407
        %v1499 = vunpack.c.h.b16 %v1407
        %v1500 = vunpack.c.l.b16 %v1408
        %v1501 = vunpack.c.h.b16 %v1408
        %v1502 = vunpack.c.l.b16 %v1409
        %v1503 = vunpack.c.h.b16 %v1409
        %v1504 = vunpack.c.l.b16 %v1410
        %v1505 = vunpack.c.h.b16 %v1410
        %v1506 = vunpack.c.l.b16 %v1411
        %v1507 = vunpack.c.h.b16 %v1411
        %v1508 = vunpack.c.l.b16 %v1412
        %v1509 = vunpack.c.h.b16 %v1412
        %v1510 = vunpack.c.l.b16 %v1413
        %v1511 = vunpack.c.h.b16 %v1413
        %v1512 = vunpack.c.l.b16 %v1414
        %v1513 = vunpack.c.h.b16 %v1414
        %v1514 = vunpack.c.l.b16 %v1415
        %v1515 = vunpack.c.h.b16 %v1415
        %v1516 = vunpack.c.l.b16 %v1416
        %v1517 = vunpack.c.h.b16 %v1416
        %v1518 = vunpack.c.l.b16 %v1417
        %v1519 = vunpack.c.h.b16 %v1417
        %v1520 = vunpack.c.l.b16 %v1418
        %v1521 = vunpack.c.h.b16 %v1418
        %v1522 = vunpack.c.l.b16 %v1419
        %v1523 = vunpack.c.h.b16 %v1419
        %v1524 = vunpack.c.l.b16 %v1420
        %v1525 = vunpack.c.h.b16 %v1420
        %v1526 = vunpack.c.l.b16 %v1421
        %v1527 = vunpack.c.h.b16 %v1421
        %v1528 = vunpack.c.l.b16 %v1422
        %v1529 = vunpack.c.h.b16 %v1422
        %v1530 = vunpack.c.l.b16 %v1423
        %v1531 = vunpack.c.h.b16 %v1423
        %v1532 = vunpack.c.l.b16 %v1424
        %v1533 = vunpack.c.h.b16 %v1424
        %v1534 = vunpack.c.l.b16 %v1425
        %v1535 = vunpack.c.h.b16 %v1425
        %v1536 = vunpack.c.l.b16 %v1426
        %v1537 = vunpack.c.h.b16 %v1426
        %v1538 = vunpack.c.l.b16 %v1427
        %v1539 = vunpack.c.h.b16 %v1427
        %v1540 = vunpack.c.l.b16 %v1428
        %v1541 = vunpack.c.h.b16 %v1428
        %v1542 = vunpack.c.l.b16 %v1429
        %v1543 = vunpack.c.h.b16 %v1429
        %v1544 = vunpack.c.l.b16 %v1430
        %v1545 = vunpack.c.h.b16 %v1430
        %v1546 = vunpack.c.l.b16 %v1431
        %v1547 = vunpack.c.h.b16 %v1431
        %v1548 = vunpack.c.l.b16 %v1432
        %v1549 = vunpack.c.h.b16 %v1432
        %v1550 = vpack.c.b16 %v1490, %v1486
        %v1551 = vpack.c.b16 %v1491, %v1487
        %v1552 = vpack.c.b16 %v1492, %v1488
        %v1553 = vpack.c.b16 %v1493, %v1489
        %v1554 = vpack.c.b16 %v1498, %v1494
        %v1555 = vpack.c.b16 %v1499, %v1495
        %v1556 = vpack.c.b16 %v1500, %v1496
        %v1557 = vpack.c.b16 %v1501, %v1497
        %v1558 = vpack.c.b16 %v1506, %v1502
        %v1559 = vpack.c.b16 %v1507, %v1503
        %v1560 = vpack.c.b16 %v1508, %v1504
        %v1561 = vpack.c.b16 %v1509, %v1505
        %v1562 = vpack.c.b16 %v1514, %v1510
        %v1563 = vpack.c.b16 %v1515, %v1511
        %v1564 = vpack.c.b16 %v1516, %v1512
        %v1565 = vpack.c.b16 %v1517, %v1513
        %v1566 = vpack.c.b16 %v1522, %v1518
        %v1567 = vpack.c.b16 %v1523, %v1519
        %v1568 = vpack.c.b16 %v1524, %v1520
        %v1569 = vpack.c.b16 %v1525, %v1521
        %v1570 = vpack.c.b16 %v1530, %v1526
        %v1571 = vpack.c.b16 %v1531, %v1527
        %v1572 = vpack.c.b16 %v1532, %v1528
        %v1573 = vpack.c.b16 %v1533, %v1529
        %v1574 = vpack.c.b16 %v1538, %v1534
        %v1575 = vpack.c.b16 %v1539, %v1535
        %v1576 = vpack.c.b16 %v1540, %v1536
        %v1577 = vpack.c.b16 %v1541, %v1537
        %v1578 = vpack.c.b16 %v1546, %v1542
        %v1579 = vpack.c.b16 %v1547, %v1543
        %v1580 = vpack.c.b16 %v1548, %v1544
        %v1581 = vpack.c.b16 %v1549, %v1545
        %1614 = vmatprep.subr.bf16.mxu0 %v1579
        %1615 = vmatpush1.bf16.msra.mxu0 %v1578
        %1616 = vmatprep.subr.bf16.mxu0 %v1575
        %1617 = vmatpush1.bf16.msra.mxu0 %v1574
        %1618 = vmatprep.subr.bf16.mxu0 %v1571
        %1619 = vmatpush1.bf16.msra.mxu0 %v1570
        %1620 = vmatprep.subr.bf16.mxu0 %v1567
        %1621 = vmatpush1.bf16.msra.mxu0 %v1566
        %1622 = vmatprep.subr.bf16.mxu0 %v1563
        %1623 = vmatpush1.bf16.msra.mxu0 %v1562
        %1624 = vmatprep.subr.bf16.mxu0 %v1559
        %1625 = vmatpush1.bf16.msra.mxu0 %v1558
        %1626 = vmatprep.subr.bf16.mxu0 %v1555
        %1627 = vmatpush1.bf16.msra.mxu0 %v1554
        %1628 = vmatprep.subr.bf16.mxu0 %v1551
        %1629 = vmatpush1.bf16.msra.mxu0 %v1550
        %1630 = vmatprep.subr.bf16.mxu0 0
        %1631 = vmatpush2.bf16.msra.mxu0 0
        %1632 = vmatprep.subr.bf16.mxu0 0
        %1633 = vmatpush2.bf16.msra.mxu0 0
        %1634 = vmatprep.subr.bf16.mxu0 0
        %1635 = vmatpush2.bf16.msra.mxu0 0
        %1636 = vmatprep.subr.bf16.mxu0 0
        %1637 = vmatpush2.bf16.msra.mxu0 0
        %1638 = vmatprep.subr.bf16.mxu0 0
        %1639 = vmatpush2.bf16.msra.mxu0 0
        %1640 = vmatprep.subr.bf16.mxu0 0
        %1641 = vmatpush2.bf16.msra.mxu0 0
        %1642 = vmatprep.subr.bf16.mxu0 0
        %1643 = vmatpush2.bf16.msra.mxu0 0
        %1644 = vmatprep.subr.bf16.mxu0 0
        %1645 = vmatpush2.bf16.msra.mxu0 0
        %1646 = vmatprep.mubr.bf16.mxu0 0
        %1647 = vmatmul.mubr.bf16.gmra.mxu0 %v1400
        %v1648 = vpop.f32.mrf.mxu0
        %v1649 = vadd.f32 %v1437, %v1648
        %v1650 = vpop.f32.mrf.mxu0
        %v1651 = vadd.f32 %v1441, %v1650
        %v1652 = vpop.f32.mrf.mxu0
        %v1653 = vpop.f32.mrf.mxu0
        %1654 = vdwg.mxu0
        %1655 = vmatprep.subr.bf16.mxu0 %v1581
        %1656 = vmatpush1.bf16.msra.mxu0 %v1580
        %1657 = vmatprep.subr.bf16.mxu0 %v1577
        %1658 = vmatpush1.bf16.msra.mxu0 %v1576
        %1659 = vmatprep.subr.bf16.mxu0 %v1573
        %1660 = vmatpush1.bf16.msra.mxu0 %v1572
        %1661 = vmatprep.subr.bf16.mxu0 %v1569
        %1662 = vmatpush1.bf16.msra.mxu0 %v1568
        %1663 = vmatprep.subr.bf16.mxu0 %v1565
        %1664 = vmatpush1.bf16.msra.mxu0 %v1564
        %1665 = vmatprep.subr.bf16.mxu0 %v1561
        %1666 = vmatpush1.bf16.msra.mxu0 %v1560
        %1667 = vmatprep.subr.bf16.mxu0 %v1557
        %1668 = vmatpush1.bf16.msra.mxu0 %v1556
        %1669 = vmatprep.subr.bf16.mxu0 %v1553
        %1670 = vmatpush1.bf16.msra.mxu0 %v1552
        %1671 = vmatprep.subr.bf16.mxu0 0
        %1672 = vmatpush2.bf16.msra.mxu0 0
        %1673 = vmatprep.subr.bf16.mxu0 0
        %1674 = vmatpush2.bf16.msra.mxu0 0
        %1675 = vmatprep.subr.bf16.mxu0 0
        %1676 = vmatpush2.bf16.msra.mxu0 0
        %1677 = vmatprep.subr.bf16.mxu0 0
        %1678 = vmatpush2.bf16.msra.mxu0 0
        %1679 = vmatprep.subr.bf16.mxu0 0
        %1680 = vmatpush2.bf16.msra.mxu0 0
        %1681 = vmatprep.subr.bf16.mxu0 0
        %1682 = vmatpush2.bf16.msra.mxu0 0
        %1683 = vmatprep.subr.bf16.mxu0 0
        %1684 = vmatpush2.bf16.msra.mxu0 0
        %1685 = vmatprep.subr.bf16.mxu0 0
        %1686 = vmatpush2.bf16.msra.mxu0 0
        %1687 = vmatprep.mubr.bf16.mxu0 0
        %1688 = vmatmul.mubr.bf16.gmra.mxu0 %v1400
        %v1689 = vpop.f32.mrf.mxu0
        %v1690 = vadd.f32 %v1445, %v1689
        %v1691 = vpop.f32.mrf.mxu0
        %v1692 = vadd.f32 %v1449, %v1691
        %v1693 = vpop.f32.mrf.mxu0
        %v1694 = vpop.f32.mrf.mxu0
        %1695 = vdwg.mxu0
        %v1696 = vmul.f32 %v1649, 0.5
        %v1697 = vmul.f32 %v1651, 0.5
        %v1698 = vmul.f32 %v1690, 0.5
        %v1699 = vmul.f32 %v1692, 0.5
        %v1700 = vmul.f32 %v1649, 0.044715
        %v1701 = vmul.f32 %v1651, 0.044715
        %v1702 = vmul.f32 %v1690, 0.044715
        %v1703 = vmul.f32 %v1692, 0.044715
        %v1704 = vmul.f32 %v1700, %v1649
        %v1705 = vmul.f32 %v1701, %v1651
        %v1706 = vmul.f32 %v1702, %v1690
        %v1707 = vmul.f32 %v1703, %v1692
        %v1708 = vmul.f32 %v1704, %v1649
        %v1709 = vmul.f32 %v1705, %v1651
        %v1710 = vmul.f32 %v1706, %v1690
        %v1711 = vmul.f32 %v1707, %v1692
        %v1712 = vadd.f32 %v1649, %v1708
        %v1713 = vadd.f32 %v1651, %v1709
        %v1714 = vadd.f32 %v1690, %v1710
        %v1715 = vadd.f32 %v1692, %v1711
        %v1716 = vmul.f32 %v1712, 0.7978846
        %v1717 = vmul.f32 %v1713, 0.7978846
        %v1718 = vmul.f32 %v1714, 0.7978846
        %v1719 = vmul.f32 %v1715, 0.7978846
        %v1720 = vtanh.pop %v1716
        %v1721 = vtanh.pop %v1717
        %v1722 = vtanh.pop %v1718
        %v1723 = vtanh.pop %v1719
        %v1724 = vadd.f32 %v1720, 1.0
        %v1725 = vadd.f32 %v1721, 1.0
        %v1726 = vadd.f32 %v1722, 1.0
        %v1727 = vadd.f32 %v1723, 1.0
        %v1728 = vmul.f32 %v1696, %v1724
        %v1729 = vmul.f32 %v1697, %v1725
        %v1730 = vmul.f32 %v1698, %v1726
        %v1731 = vmul.f32 %v1699, %v1727
        %v1732 = vpack.c.bf16 %v1728, %v1728
        %v1733 = vpack.c.bf16 %v1729, %v1729
        %v1734 = vpack.c.bf16 %v1730, %v1730
        %v1735 = vpack.c.bf16 %v1731, %v1731
        %v1736 = vld [vmem:[%s442] sm:$0xf]
        %v1737 = vld [vmem:[%s442 + $0x4] sm:$0xf]
        %v1738 = vld [vmem:[%s442 + $0x8] sm:$0xf]
        %v1739 = vld [vmem:[%s442 + $0xc] sm:$0xf]
        %v1740 = vld [vmem:[%s442 + $0x10] sm:$0xf]
        %v1741 = vld [vmem:[%s442 + $0x14] sm:$0xf]
        %v1742 = vld [vmem:[%s442 + $0x18] sm:$0xf]
        %v1743 = vld [vmem:[%s442 + $0x1c] sm:$0xf]
        %v1744 = vld [vmem:[%s442 + $0x20] sm:$0xf]
        %v1745 = vld [vmem:[%s442 + $0x24] sm:$0xf]
        %v1746 = vld [vmem:[%s442 + $0x28] sm:$0xf]
        %v1747 = vld [vmem:[%s442 + $0x2c] sm:$0xf]
        %v1748 = vld [vmem:[%s442 + $0x30] sm:$0xf]
        %v1749 = vld [vmem:[%s442 + $0x34] sm:$0xf]
        %v1750 = vld [vmem:[%s442 + $0x38] sm:$0xf]
        %v1751 = vld [vmem:[%s442 + $0x3c] sm:$0xf]
        %v1752 = vld [vmem:[%s442 + $0x40] sm:$0xf]
        %v1753 = vld [vmem:[%s442 + $0x44] sm:$0xf]
        %v1754 = vld [vmem:[%s442 + $0x48] sm:$0xf]
        %v1755 = vld [vmem:[%s442 + $0x4c] sm:$0xf]
        %v1756 = vld [vmem:[%s442 + $0x50] sm:$0xf]
        %v1757 = vld [vmem:[%s442 + $0x54] sm:$0xf]
        %v1758 = vld [vmem:[%s442 + $0x58] sm:$0xf]
        %v1759 = vld [vmem:[%s442 + $0x5c] sm:$0xf]
        %v1760 = vld [vmem:[%s442 + $0x60] sm:$0xf]
        %v1761 = vld [vmem:[%s442 + $0x64] sm:$0xf]
        %v1762 = vld [vmem:[%s442 + $0x68] sm:$0xf]
        %v1763 = vld [vmem:[%s442 + $0x6c] sm:$0xf]
        %v1764 = vld [vmem:[%s442 + $0x70] sm:$0xf]
        %v1765 = vld [vmem:[%s442 + $0x74] sm:$0xf]
        %v1766 = vld [vmem:[%s442 + $0x78] sm:$0xf]
        %v1767 = vld [vmem:[%s442 + $0x7c] sm:$0xf]
        %v1768 = vld [vmem:[%s442 + $0x80] sm:$0xf]
        %v1769 = vld [vmem:[%s442 + $0x84] sm:$0xf]
        %v1770 = vld [vmem:[%s442 + $0x88] sm:$0xf]
        %v1771 = vld [vmem:[%s442 + $0x8c] sm:$0xf]
        %v1772 = vld [vmem:[%s442 + $0x90] sm:$0xf]
        %v1773 = vld [vmem:[%s442 + $0x94] sm:$0xf]
        %v1774 = vld [vmem:[%s442 + $0x98] sm:$0xf]
        %v1775 = vld [vmem:[%s442 + $0x9c] sm:$0xf]
        %v1776 = vld [vmem:[%s442 + $0xa0] sm:$0xf]
        %v1777 = vld [vmem:[%s442 + $0xa4] sm:$0xf]
        %v1778 = vld [vmem:[%s442 + $0xa8] sm:$0xf]
        %v1779 = vld [vmem:[%s442 + $0xac] sm:$0xf]
        %v1780 = vld [vmem:[%s442 + $0xb0] sm:$0xf]
        %v1781 = vld [vmem:[%s442 + $0xb4] sm:$0xf]
        %v1782 = vld [vmem:[%s442 + $0xb8] sm:$0xf]
        %v1783 = vld [vmem:[%s442 + $0xbc] sm:$0xf]
        %v1784 = vld [vmem:[%s442 + $0xc0] sm:$0xf]
        %v1785 = vld [vmem:[%s442 + $0xc4] sm:$0xf]
        %v1786 = vld [vmem:[%s442 + $0xc8] sm:$0xf]
        %v1787 = vld [vmem:[%s442 + $0xcc] sm:$0xf]
        %v1788 = vld [vmem:[%s442 + $0xd0] sm:$0xf]
        %v1789 = vld [vmem:[%s442 + $0xd4] sm:$0xf]
        %v1790 = vld [vmem:[%s442 + $0xd8] sm:$0xf]
        %v1791 = vld [vmem:[%s442 + $0xdc] sm:$0xf]
        %v1792 = vld [vmem:[%s442 + $0xe0] sm:$0xf]
        %v1793 = vld [vmem:[%s442 + $0xe4] sm:$0xf]
        %v1794 = vld [vmem:[%s442 + $0xe8] sm:$0xf]
        %v1795 = vld [vmem:[%s442 + $0xec] sm:$0xf]
        %v1796 = vld [vmem:[%s442 + $0xf0] sm:$0xf]
        %v1797 = vld [vmem:[%s442 + $0xf4] sm:$0xf]
        %v1798 = vld [vmem:[%s442 + $0xf8] sm:$0xf]
        %v1799 = vld [vmem:[%s442 + $0xfc] sm:$0xf]
        %v1864 = vunpack.c.l.b16 %v1736
        %v1865 = vunpack.c.l.b16 %v1737
        %v1866 = vunpack.c.l.b16 %v1738
        %v1867 = vunpack.c.l.b16 %v1739
        %v1868 = vunpack.c.l.b16 %v1740
        %v1869 = vunpack.c.l.b16 %v1741
        %v1870 = vunpack.c.l.b16 %v1742
        %v1871 = vunpack.c.l.b16 %v1743
        %v1872 = vunpack.c.l.b16 %v1744
        %v1873 = vunpack.c.l.b16 %v1745
        %v1874 = vunpack.c.l.b16 %v1746
        %v1875 = vunpack.c.l.b16 %v1747
        %v1876 = vunpack.c.l.b16 %v1748
        %v1877 = vunpack.c.l.b16 %v1749
        %v1878 = vunpack.c.l.b16 %v1750
        %v1879 = vunpack.c.l.b16 %v1751
        %v1880 = vunpack.c.l.b16 %v1752
        %v1881 = vunpack.c.l.b16 %v1753
        %v1882 = vunpack.c.l.b16 %v1754
        %v1883 = vunpack.c.l.b16 %v1755
        %v1884 = vunpack.c.l.b16 %v1756
        %v1885 = vunpack.c.l.b16 %v1757
        %v1886 = vunpack.c.l.b16 %v1758
        %v1887 = vunpack.c.l.b16 %v1759
        %v1888 = vunpack.c.l.b16 %v1760
        %v1889 = vunpack.c.l.b16 %v1761
        %v1890 = vunpack.c.l.b16 %v1762
        %v1891 = vunpack.c.l.b16 %v1763
        %v1892 = vunpack.c.l.b16 %v1764
        %v1893 = vunpack.c.l.b16 %v1765
        %v1894 = vunpack.c.l.b16 %v1766
        %v1895 = vunpack.c.l.b16 %v1767
        %v1896 = vunpack.c.l.b16 %v1768
        %v1897 = vunpack.c.l.b16 %v1769
        %v1898 = vunpack.c.l.b16 %v1770
        %v1899 = vunpack.c.l.b16 %v1771
        %v1900 = vunpack.c.l.b16 %v1772
        %v1901 = vunpack.c.l.b16 %v1773
        %v1902 = vunpack.c.l.b16 %v1774
        %v1903 = vunpack.c.l.b16 %v1775
        %v1904 = vunpack.c.l.b16 %v1776
        %v1905 = vunpack.c.l.b16 %v1777
        %v1906 = vunpack.c.l.b16 %v1778
        %v1907 = vunpack.c.l.b16 %v1779
        %v1908 = vunpack.c.l.b16 %v1780
        %v1909 = vunpack.c.l.b16 %v1781
        %v1910 = vunpack.c.l.b16 %v1782
        %v1911 = vunpack.c.l.b16 %v1783
        %v1912 = vunpack.c.l.b16 %v1784
        %v1913 = vunpack.c.l.b16 %v1785
        %v1914 = vunpack.c.l.b16 %v1786
        %v1915 = vunpack.c.l.b16 %v1787
        %v1916 = vunpack.c.l.b16 %v1788
        %v1917 = vunpack.c.l.b16 %v1789
        %v1918 = vunpack.c.l.b16 %v1790
        %v1919 = vunpack.c.l.b16 %v1791
        %v1920 = vunpack.c.l.b16 %v1792
        %v1921 = vunpack.c.l.b16 %v1793
        %v1922 = vunpack.c.l.b16 %v1794
        %v1923 = vunpack.c.l.b16 %v1795
        %v1924 = vunpack.c.l.b16 %v1796
        %v1925 = vunpack.c.l.b16 %v1797
        %v1926 = vunpack.c.l.b16 %v1798
        %v1927 = vunpack.c.l.b16 %v1799
        %v1928 = vpack.c.b16 %v1865, %v1864
        %v1929 = vpack.c.b16 %v1867, %v1866
        %v1930 = vpack.c.b16 %v1869, %v1868
        %v1931 = vpack.c.b16 %v1871, %v1870
        %v1932 = vpack.c.b16 %v1873, %v1872
        %v1933 = vpack.c.b16 %v1875, %v1874
        %v1934 = vpack.c.b16 %v1877, %v1876
        %v1935 = vpack.c.b16 %v1879, %v1878
        %v1936 = vpack.c.b16 %v1881, %v1880
        %v1937 = vpack.c.b16 %v1883, %v1882
        %v1938 = vpack.c.b16 %v1885, %v1884
        %v1939 = vpack.c.b16 %v1887, %v1886
        %v1940 = vpack.c.b16 %v1889, %v1888
        %v1941 = vpack.c.b16 %v1891, %v1890
        %v1942 = vpack.c.b16 %v1893, %v1892
        %v1943 = vpack.c.b16 %v1895, %v1894
        %v1944 = vpack.c.b16 %v1897, %v1896
        %v1945 = vpack.c.b16 %v1899, %v1898
        %v1946 = vpack.c.b16 %v1901, %v1900
        %v1947 = vpack.c.b16 %v1903, %v1902
        %v1948 = vpack.c.b16 %v1905, %v1904
        %v1949 = vpack.c.b16 %v1907, %v1906
        %v1950 = vpack.c.b16 %v1909, %v1908
        %v1951 = vpack.c.b16 %v1911, %v1910
        %v1952 = vpack.c.b16 %v1913, %v1912
        %v1953 = vpack.c.b16 %v1915, %v1914
        %v1954 = vpack.c.b16 %v1917, %v1916
        %v1955 = vpack.c.b16 %v1919, %v1918
        %v1956 = vpack.c.b16 %v1921, %v1920
        %v1957 = vpack.c.b16 %v1923, %v1922
        %v1958 = vpack.c.b16 %v1925, %v1924
        %v1959 = vpack.c.b16 %v1927, %v1926
        %1992 = vmatprep.subr.bf16.mxu0 0
        %1993 = vmatpush1.bf16.msra.mxu0 %v1935
        %1994 = vmatprep.subr.bf16.mxu0 0
        %1995 = vmatpush1.bf16.msra.mxu0 %v1934
        %1996 = vmatprep.subr.bf16.mxu0 0
        %1997 = vmatpush1.bf16.msra.mxu0 %v1933
        %1998 = vmatprep.subr.bf16.mxu0 0
        %1999 = vmatpush1.bf16.msra.mxu0 %v1932
        %2000 = vmatprep.subr.bf16.mxu0 0
        %2001 = vmatpush1.bf16.msra.mxu0 %v1931
        %2002 = vmatprep.subr.bf16.mxu0 0
        %2003 = vmatpush1.bf16.msra.mxu0 %v1930
        %2004 = vmatprep.subr.bf16.mxu0 0
        %2005 = vmatpush1.bf16.msra.mxu0 %v1929
        %2006 = vmatprep.subr.bf16.mxu0 0
        %2007 = vmatpush1.bf16.msra.mxu0 %v1928
        %2008 = vmatprep.subr.bf16.mxu0 0
        %2009 = vmatpush2.bf16.msra.mxu0 %v1943
        %2010 = vmatprep.subr.bf16.mxu0 0
        %2011 = vmatpush2.bf16.msra.mxu0 %v1942
        %2012 = vmatprep.subr.bf16.mxu0 0
        %2013 = vmatpush2.bf16.msra.mxu0 %v1941
        %2014 = vmatprep.subr.bf16.mxu0 0
        %2015 = vmatpush2.bf16.msra.mxu0 %v1940
        %2016 = vmatprep.subr.bf16.mxu0 0
        %2017 = vmatpush2.bf16.msra.mxu0 %v1939
        %2018 = vmatprep.subr.bf16.mxu0 0
        %2019 = vmatpush2.bf16.msra.mxu0 %v1938
        %2020 = vmatprep.subr.bf16.mxu0 0
        %2021 = vmatpush2.bf16.msra.mxu0 %v1937
        %2022 = vmatprep.subr.bf16.mxu0 0
        %2023 = vmatpush2.bf16.msra.mxu0 %v1936
        %2024 = vmatprep.mubr.bf16.mxu0 %v1733
        %2025 = vmatmul.mubr.bf16.gmra.mxu0 %v1732
        %v2026 = vpop.f32.mrf.mxu0
        %v2027 = vadd.f32 %v545, %v2026
        %v2028 = vpop.f32.mrf.mxu0
        %v2029 = vpop.f32.mrf.mxu0
        %v2030 = vpop.f32.mrf.mxu0
        %2031 = vdwg.mxu0
        %2032 = vmatprep.subr.bf16.mxu0 0
        %2033 = vmatpush1.bf16.msra.mxu0 %v1951
        %2034 = vmatprep.subr.bf16.mxu0 0
        %2035 = vmatpush1.bf16.msra.mxu0 %v1950
        %2036 = vmatprep.subr.bf16.mxu0 0
        %2037 = vmatpush1.bf16.msra.mxu0 %v1949
        %2038 = vmatprep.subr.bf16.mxu0 0
        %2039 = vmatpush1.bf16.msra.mxu0 %v1948
        %2040 = vmatprep.subr.bf16.mxu0 0
        %2041 = vmatpush1.bf16.msra.mxu0 %v1947
        %2042 = vmatprep.subr.bf16.mxu0 0
        %2043 = vmatpush1.bf16.msra.mxu0 %v1946
        %2044 = vmatprep.subr.bf16.mxu0 0
        %2045 = vmatpush1.bf16.msra.mxu0 %v1945
        %2046 = vmatprep.subr.bf16.mxu0 0
        %2047 = vmatpush1.bf16.msra.mxu0 %v1944
        %2048 = vmatprep.subr.bf16.mxu0 0
        %2049 = vmatpush2.bf16.msra.mxu0 %v1959
        %2050 = vmatprep.subr.bf16.mxu0 0
        %2051 = vmatpush2.bf16.msra.mxu0 %v1958
        %2052 = vmatprep.subr.bf16.mxu0 0
        %2053 = vmatpush2.bf16.msra.mxu0 %v1957
        %2054 = vmatprep.subr.bf16.mxu0 0
        %2055 = vmatpush2.bf16.msra.mxu0 %v1956
        %2056 = vmatprep.subr.bf16.mxu0 0
        %2057 = vmatpush2.bf16.msra.mxu0 %v1955
        %2058 = vmatprep.subr.bf16.mxu0 0
        %2059 = vmatpush2.bf16.msra.mxu0 %v1954
        %2060 = vmatprep.subr.bf16.mxu0 0
        %2061 = vmatpush2.bf16.msra.mxu0 %v1953
        %2062 = vmatprep.subr.bf16.mxu0 0
        %2063 = vmatpush2.bf16.msra.mxu0 %v1952
        %2064 = vmatprep.mubr.bf16.mxu0 %v1735
        %2065 = vmatmul.mubr.bf16.gmra.mxu0 %v1734
        %v2066 = vpop.f32.mrf.mxu0
        %v2067 = vadd.f32 %v2027, %v2066
        %v2068 = vpop.f32.mrf.mxu0
        %v2069 = vpop.f32.mrf.mxu0
        %v2070 = vpop.f32.mrf.mxu0
        %2071 = vdwg.mxu0
        %v2072 = vadd.f32 %v1386, %v2067
        %2073 = vst [vmem:[#allocation2] sm:$0xff] %v2072
        %p2074 = scmp.eq.s32.totalorder %s35, 1
        // Predicated region
        $region77: #{gpt2_lm_forward.1} parent=55 // pred_check
          %p2075 = pneg %p2074
        $region78: #{gpt2_lm_forward.1} parent=55 // pred_check_branch
          %2077 = sbr.rel (%p2075) target = $region80
        $region79: #{gpt2_lm_forward.1} parent=55 // pred_region
          %v2078 = vld [vmem:[#allocation10] sm:$0x1]
          %v2079 = vld [vmem:[#allocation10 + $0x1] sm:$0x1]
          %2080 = vadd.xlane.f32.xlu0 %v2072
          %v2081 = vpop.xlane.xlu0 %2080
          %v2082 = vmul.f32 %v2081, %v548
          %v2083 = vsub.f32 %v2072, %v2082
          %v2084 = vmul.f32 %v2083, %v2083
          %2085 = vadd.xlane.f32.xlu0 %v2084
          %v2086 = vpop.xlane.xlu0 %2085
          %v2087 = vmul.f32 %v2086, %v548
          %v2088 = vadd.f32 %v2087, 1e-05
          %v2089 = vrsqrt.pop %v2088
          %v2090 = vmul.f32 %v2083, %v2089
          %v2091 = vlaneseq
          %v2092 = vshrl.u32 %v2091, 7
          %v2093 = vsub.s32 0, %v2092
          %v2094 = vrot.slane %v2078, %v2093
          %v2095 = vmul.f32 %v2090, %v2094
          %v2096 = vlaneseq
          %v2097 = vshrl.u32 %v2096, 7
          %v2098 = vsub.s32 0, %v2097
          %v2099 = vrot.slane %v2079, %v2098
          %v2100 = vadd.f32 %v2095, %v2099
          %v2101 = vpack.c.bf16 %v2100, %v2100
          %v2102 = vld [vmem:[%s8] sm:$0xf]
          %v2103 = vld [vmem:[%s8 + $0x4] sm:$0xf]
          %v2104 = vld [vmem:[%s8 + $0x8] sm:$0xf]
          %v2105 = vld [vmem:[%s8 + $0xc] sm:$0xf]
          %v2106 = vld [vmem:[%s8 + $0x10] sm:$0xf]
          %v2107 = vld [vmem:[%s8 + $0x14] sm:$0xf]
          %v2108 = vld [vmem:[%s8 + $0x18] sm:$0xf]
          %v2109 = vld [vmem:[%s8 + $0x1c] sm:$0xf]
          %v2110 = vld [vmem:[%s8 + $0x20] sm:$0xf]
          %v2111 = vld [vmem:[%s8 + $0x24] sm:$0xf]
          %v2112 = vld [vmem:[%s8 + $0x28] sm:$0xf]
          %v2113 = vld [vmem:[%s8 + $0x2c] sm:$0xf]
          %v2114 = vld [vmem:[%s8 + $0x30] sm:$0xf]
          %v2115 = vld [vmem:[%s8 + $0x34] sm:$0xf]
          %v2116 = vld [vmem:[%s8 + $0x38] sm:$0xf]
          %v2117 = vld [vmem:[%s8 + $0x3c] sm:$0xf]
          %v2134 = vunpack.c.l.b16 %v2102
          %v2135 = vunpack.c.l.b16 %v2103
          %v2136 = vunpack.c.l.b16 %v2104
          %v2137 = vunpack.c.l.b16 %v2105
          %v2138 = vunpack.c.l.b16 %v2106
          %v2139 = vunpack.c.l.b16 %v2107
          %v2140 = vunpack.c.l.b16 %v2108
          %v2141 = vunpack.c.l.b16 %v2109
          %v2142 = vunpack.c.l.b16 %v2110
          %v2143 = vunpack.c.l.b16 %v2111
          %v2144 = vunpack.c.l.b16 %v2112
          %v2145 = vunpack.c.l.b16 %v2113
          %v2146 = vunpack.c.l.b16 %v2114
          %v2147 = vunpack.c.l.b16 %v2115
          %v2148 = vunpack.c.l.b16 %v2116
          %v2149 = vunpack.c.l.b16 %v2117
          %v2150 = vpack.c.b16 %v2135, %v2134
          %v2151 = vpack.c.b16 %v2137, %v2136
          %v2152 = vpack.c.b16 %v2139, %v2138
          %v2153 = vpack.c.b16 %v2141, %v2140
          %v2154 = vpack.c.b16 %v2143, %v2142
          %v2155 = vpack.c.b16 %v2145, %v2144
          %v2156 = vpack.c.b16 %v2147, %v2146
          %v2157 = vpack.c.b16 %v2149, %v2148
          %2166 = vmatprep.subr.bf16.mxu0 0
          %2167 = vmatpush1.bf16.msra.mxu0 %v2157
          %2168 = vmatprep.subr.bf16.mxu0 0
          %2169 = vmatpush1.bf16.msra.mxu0 %v2156
          %2170 = vmatprep.subr.bf16.mxu0 0
          %2171 = vmatpush1.bf16.msra.mxu0 %v2155
          %2172 = vmatprep.subr.bf16.mxu0 0
          %2173 = vmatpush1.bf16.msra.mxu0 %v2154
          %2174 = vmatprep.subr.bf16.mxu0 0
          %2175 = vmatpush1.bf16.msra.mxu0 %v2153
          %2176 = vmatprep.subr.bf16.mxu0 0
          %2177 = vmatpush1.bf16.msra.mxu0 %v2152
          %2178 = vmatprep.subr.bf16.mxu0 0
          %2179 = vmatpush1.bf16.msra.mxu0 %v2151
          %2180 = vmatprep.subr.bf16.mxu0 0
          %2181 = vmatpush1.bf16.msra.mxu0 %v2150
          %2182 = vmatprep.subr.bf16.mxu0 0
          %2183 = vmatpush2.bf16.msra.mxu0 0
          %2184 = vmatprep.subr.bf16.mxu0 0
          %2185 = vmatpush2.bf16.msra.mxu0 0
          %2186 = vmatprep.subr.bf16.mxu0 0
          %2187 = vmatpush2.bf16.msra.mxu0 0
          %2188 = vmatprep.subr.bf16.mxu0 0
          %2189 = vmatpush2.bf16.msra.mxu0 0
          %2190 = vmatprep.subr.bf16.mxu0 0
          %2191 = vmatpush2.bf16.msra.mxu0 0
          %2192 = vmatprep.subr.bf16.mxu0 0
          %2193 = vmatpush2.bf16.msra.mxu0 0
          %2194 = vmatprep.subr.bf16.mxu0 0
          %2195 = vmatpush2.bf16.msra.mxu0 0
          %2196 = vmatprep.subr.bf16.mxu0 0
          %2197 = vmatpush2.bf16.msra.mxu0 0
          %2198 = vmatprep.mubr.bf16.mxu0 0
          %2199 = vmatmul.mubr.bf16.gmra.mxu0 %v2101
          %v2200 = vpop.f32.mrf.mxu0
          %v2201 = vadd.f32 0.0, %v2200
          %v2202 = vpop.f32.mrf.mxu0
          %v2203 = vpop.f32.mrf.mxu0
          %v2204 = vpop.f32.mrf.mxu0
          %2205 = vdwg.mxu0
          %2206 = vst [vmem:[%s508] sm:$0xff] %v2201
        $region80: #{gpt2_lm_forward.1} parent=55 // pred_fallthru
          _
        %s2207 = sand.u32 %s274, 1
        %s2208 = scalar_lea.sflag [#allocation6], %s2207
        %s2209 = sand.u32 %s274, 1
        %s2210 = smul.addr %s2209, 8
        %s2211 = scalar_lea.vmem [#allocation12], %s2210
        // Predicated region
        $region81: #{gpt2_lm_forward.1} parent=55 // pred_check
          %p2212 = pneg %p284
        $region82: #{gpt2_lm_forward.1} parent=55 // pred_check_branch
          %2214 = sbr.rel (%p2212) target = $region84
        $region83: #{gpt2_lm_forward.1} parent=55 // pred_region
          %s2216 = ssub.s32 128, 128
          %2217 = vsyncadd %s2208, %s2216
          %s2218 = smul.addr %s34, 128
          %s2219 = scalar_lea.hbm %s9, %s2218
          %s2221 = sshll.u32 %s2211, 4
          %s2222 = int_to_ptr.vmem [resolvable:$true] %s2221
          %2224 = dma.vmem_to_hbm [thread:$0]  %s2222, 128, %s2219, %s2208
        $region84: #{gpt2_lm_forward.1} parent=55 // pred_fallthru
          _
      $region56: #{gpt2_lm_forward.1} parent=5 // pred_fallthru
        _
      %p2225 = scmp.le.s32.totalorder 2, %s25
      // Predicated region
      $region85: #{gpt2_lm_forward.1} parent=5 // pred_check
        %p2226 = pneg %p2225
      $region86: #{gpt2_lm_forward.1} parent=5 // pred_check_branch
        %2228 = sbr.rel (%p2226) target = $region88
      $region87: #{gpt2_lm_forward.1} parent=5 // pred_region
        %s2229 = ssub.s32 %s25, 2
        // Predicated region
        $region89: #{gpt2_lm_forward.1} parent=87 // pred_check
          %p2230 = pneg %p290
        $region90: #{gpt2_lm_forward.1} parent=87 // pred_check_branch
          %2232 = sbr.rel (%p2230) target = $region92
        $region91: #{gpt2_lm_forward.1} parent=87 // pred_region
          %s2233 = sand.u32 %s275, 1
          %s2234 = scalar_lea.sflag [#allocation6], %s2233
          %s2235 = sand.u32 %s275, 1
          %s2236 = smul.addr %s2235, 8
          %s2237 = scalar_lea.vmem [#allocation12], %s2236
          %2238 = dma.done %s2234, 128
        $region92: #{gpt2_lm_forward.1} parent=87 // pred_fallthru
          _
      $region88: #{gpt2_lm_forward.1} parent=5 // pred_fallthru
        _
    $region6: #{gpt2_lm_forward.1} parent=1 // loop_footer
      %s29 = sadd.s32 1, %s25
    $region7: #{gpt2_lm_forward.1} parent=1 // loop_footer_branch
      %24 = sbr.rel target = $region3
    $region8: #{gpt2_lm_forward.1} parent=1 // loop_exit
      _
    %2239 = vsyncpa [#allocation5], 1
    %s2240 = scalar_lea.sflag [#allocation5], 1
    %2241 = vsyncpa %s2240, 1
    %2242 = vsyncpa [#allocation8], 1
    %s2243 = scalar_lea.sflag [#allocation8], 1
    %2244 = vsyncpa %s2243, 1
    %2245 = vsyncpa [#allocation11], 1
    %2246 = vsyncpa [#allocation6], 1
    %s2247 = scalar_lea.sflag [#allocation6], 1
    %2248 = vsyncpa %s2247, 1

</llo_original>
